<compile_context>
chip_gen: v7x
topology: tpu7x:2x2x1
jax: 0.10.0
libtpu: 0.0.40
codegen_flags: <defaults>
</compile_context>

<pallas_src>
import functools

import numpy as np
import jax
import jax.numpy as jnp
from jax.experimental import pallas as pl
from jax.experimental.pallas import tpu as pltpu


# ----------------------------------------------------------------------------
# Generation-aware VMEM budgets
# ----------------------------------------------------------------------------
def _vmem_capacity_bytes():
    try:
        return int(pltpu.get_tpu_info().vmem_capacity_bytes)
    except Exception:
        return 64 * 1024 * 1024               # conservative (v7x-sized) fallback


_VMEM_CAP = _vmem_capacity_bytes()
_SMALL_VMEM = _VMEM_CAP <= 96 * 1024 * 1024   # v7x: 64 MiB / TC; v5e/v6e: 128 MiB
VMEM_LIMIT = (30 if _SMALL_VMEM else 64) * 1024 * 1024
_WEIGHT_TILE_BUDGET = (6 if _SMALL_VMEM else 16) * 1024 * 1024    # bf16 weight tile
_FUSE_VMEM_BUDGET = (22 if _SMALL_VMEM else 52) * 1024 * 1024     # fused conv_block


def _pick_tn(c_in_total, c_out, taps):
    """Largest C_out tile (divisor of c_out) whose bf16 weight slab fits the budget."""
    if c_out <= 128:
        return c_out
    tn = c_out
    while tn > 128 and taps * c_in_total * tn * 2 > _WEIGHT_TILE_BUDGET:
        tn //= 2
    return tn


def _pad_slab(x, Np):
    """NHWC -> width/height zero-padded, row-flattened bf16 slab [B, Np, C]."""
    B, H, W, C = x.shape
    xp = jnp.pad(x.astype(jnp.bfloat16), ((0, 0), (1, 2), (1, 1), (0, 0)))
    return xp.reshape(B, Np, C)


def _offsets3x3(Wp):
    return tuple(dy * Wp + dx for dy in range(3) for dx in range(3))


# ----------------------------------------------------------------------------
# Single 3x3 conv (+folded BN) + ReLU (+softmax), multi-input (concat-free)
# ----------------------------------------------------------------------------
def _conv3x3_kernel(*refs, n_in, offs, m, relu, softmax):
    # refs: x_1..x_n [Np, C_i] bf16, w_1..w_n [9, C_i, tn] bf16, b [1, tn] f32, o [m, tn]
    x_refs = refs[:n_in]
    w_refs = refs[n_in:2 * n_in]
    b_ref = refs[2 * n_in]
    o_ref = refs[2 * n_in + 1]
    acc = jnp.zeros(o_ref.shape, jnp.float32)
    for x_ref, w_ref in zip(x_refs, w_refs):
        for k, off in enumerate(offs):                   # 9 shifted MXU matmuls / input
            acc = acc + jnp.dot(x_ref[pl.ds(off, m), :], w_ref[k],
                                preferred_element_type=jnp.float32)
    y = acc + b_ref[...]
    if relu:
        y = jnp.maximum(y, 0.0)
    if softmax:                                          # softmax over channels (lanes)
        y = y - jnp.max(y, axis=-1, keepdims=True)
        e = jnp.exp(y)
        y = e / jnp.sum(e, axis=-1, keepdims=True)
    o_ref[...] = y


def conv3x3_bn_act(xs, ws, b, *, relu=True, softmax=False):
    """xs: list of NHWC f32; ws: list of [9, C_i, C_out] bf16 (BN folded); b: [C_out]."""
    B, H, W, _ = xs[0].shape
    C_out = ws[0].shape[-1]
    Wp, Np, M = W + 2, (H + 3) * (W + 2), H * (W + 2)
    c_in_total = sum(x.shape[-1] for x in xs)
    tn = _pick_tn(c_in_total, C_out, 9)
    assert C_out % tn == 0
    if softmax:
        assert tn == C_out, "softmax fusion needs the full channel dim in one tile"

    xps = [_pad_slab(x, Np) for x in xs]
    kernel = functools.partial(_conv3x3_kernel, n_in=len(xs), offs=_offsets3x3(Wp),
                               m=M, relu=relu, softmax=softmax)
    in_specs = ([pl.BlockSpec((None, Np, x.shape[-1]), lambda j, bb: (bb, 0, 0))
                 for x in xs]
                + [pl.BlockSpec((9, w.shape[1], tn), lambda j, bb: (0, 0, j))
                   for w in ws]
                + [pl.BlockSpec((1, tn), lambda j, bb: (0, j))])
    out = pl.pallas_call(
        kernel,
        out_shape=jax.ShapeDtypeStruct((B, M, C_out), jnp.float32),
        grid_spec=pltpu.PrefetchScalarGridSpec(
            num_scalar_prefetch=0,
            grid=(C_out // tn, B),                 # weights resident across inner batch
            in_specs=in_specs,
            out_specs=pl.BlockSpec((None, M, tn), lambda j, bb: (bb, 0, j)),
        ),
        compiler_params=pltpu.CompilerParams(
            dimension_semantics=("parallel", "parallel"),
            vmem_limit_bytes=VMEM_LIMIT),
    )(*xps, *ws, b.reshape(1, C_out).astype(jnp.float32))
    # drop the junk columns that correspond to the right zero-pad positions
    return out.reshape(B, H, Wp, C_out)[:, :, :W, :]


# ----------------------------------------------------------------------------
# Fused conv_block: conv1+BN+ReLU -> VMEM scratch -> conv2+BN+ReLU (+softmax)
# ----------------------------------------------------------------------------
def _conv_block_kernel(*refs, n_in, offs1, offs2, m, store_off, softmax):
    x_refs = refs[:n_in]
    w1_refs = refs[n_in:2 * n_in]
    b1_ref, w2_ref, b2_ref, mask_ref, o_ref, mid_ref = refs[2 * n_in:]

    # ---- conv1 (+folded BN) + ReLU into the zero-padded bf16 mid scratch ----
    acc1 = jnp.zeros((m, mid_ref.shape[-1]), jnp.float32)
    for x_ref, w_ref in zip(x_refs, w1_refs):
        for k, off in enumerate(offs1):
            acc1 = acc1 + jnp.dot(x_ref[pl.ds(off, m), :], w_ref[k],
                                  preferred_element_type=jnp.float32)
    # mask kills the 2 junk columns per row: they land on conv2's zero-pad positions
    y1 = jnp.maximum(acc1 + b1_ref[...], 0.0) * mask_ref[...]
    mid_ref[...] = jnp.zeros_like(mid_ref)
    mid_ref[pl.ds(store_off, m), :] = y1.astype(mid_ref.dtype)

    # ---- conv2 (+folded BN) + ReLU (+channel softmax) from the scratch ----
    acc2 = jnp.zeros(o_ref.shape, jnp.float32)
    for k, off in enumerate(offs2):
        acc2 = acc2 + jnp.dot(mid_ref[pl.ds(off, m), :], w2_ref[k],
                              preferred_element_type=jnp.float32)
    y2 = jnp.maximum(acc2 + b2_ref[...], 0.0)
    if softmax:
        y2 = y2 - jnp.max(y2, axis=-1, keepdims=True)
        e = jnp.exp(y2)
        y2 = e / jnp.sum(e, axis=-1, keepdims=True)
    o_ref[...] = y2


def conv_block_fused(xs, w1s, b1, w2, b2, *, softmax=False):
    """xs: list NHWC f32; w1s: list [9, C_i, C_mid] bf16; w2: [9, C_mid, C_out] bf16."""
    B, H, W, _ = xs[0].shape
    C_mid = w2.shape[1]
    C_out = w2.shape[-1]
    Wp, Np, M = W + 2, (H + 3) * (W + 2), H * (W + 2)
    tn = _pick_tn(C_mid, C_out, 9)
    assert C_out % tn == 0
    if softmax:
        assert tn == C_out, "softmax fusion needs the full channel dim in one tile"

    store_off = ((Wp + 1 + 7) // 8) * 8          # sublane-aligned start of valid region
    delta = store_off - (Wp + 1)
    Np_mid = Np + delta
    offs1 = _offsets3x3(Wp)
    offs2 = tuple(o + delta for o in offs1)

    xps = [_pad_slab(x, Np) for x in xs]
    col = np.arange(M) % Wp                      # static junk-column mask for conv1 out
    mask = jnp.asarray((col < W).astype(np.float32)).reshape(M, 1)

    kernel = functools.partial(_conv_block_kernel, n_in=len(xs), offs1=offs1,
                               offs2=offs2, m=M, store_off=store_off, softmax=softmax)
    in_specs = ([pl.BlockSpec((None, Np, x.shape[-1]), lambda j, bb: (bb, 0, 0))
                 for x in xs]
                + [pl.BlockSpec((9, w.shape[1], C_mid), lambda j, bb: (0, 0, 0))
                   for w in w1s]
                + [pl.BlockSpec((1, C_mid), lambda j, bb: (0, 0)),
                   pl.BlockSpec((9, C_mid, tn), lambda j, bb: (0, 0, j)),
                   pl.BlockSpec((1, tn), lambda j, bb: (0, j)),
                   pl.BlockSpec((M, 1), lambda j, bb: (0, 0))])
    out = pl.pallas_call(
        kernel,
        out_shape=jax.ShapeDtypeStruct((B, M, C_out), jnp.float32),
        grid_spec=pltpu.PrefetchScalarGridSpec(
            num_scalar_prefetch=0,
            grid=(C_out // tn, B),
            in_specs=in_specs,
            out_specs=pl.BlockSpec((None, M, tn), lambda j, bb: (bb, 0, j)),
            scratch_shapes=[pltpu.VMEM((Np_mid, C_mid), jnp.bfloat16)],
        ),
        compiler_params=pltpu.CompilerParams(
            dimension_semantics=("parallel", "parallel"),
            vmem_limit_bytes=VMEM_LIMIT),
    )(*xps, *w1s, b1.reshape(1, C_mid).astype(jnp.float32),
      w2, b2.reshape(1, C_out).astype(jnp.float32), mask)
    return out.reshape(B, H, Wp, C_out)[:, :, :W, :]


def _fused_vmem_estimate(c_ins, c_mid, c_out, H, W):
    tn = _pick_tn(c_mid, c_out, 9)
    Np, M = (H + 3) * (W + 2), H * (W + 2)
    w1 = 9 * sum(c_ins) * c_mid * 2
    w2 = 9 * c_mid * tn * 2
    slabs = sum(Np * c * 2 for c in c_ins)
    outb = M * tn * 4
    scratch = (Np + 8) * c_mid * 2
    return 2 * (w1 + w2 + slabs + outb) + scratch        # double-buffered specs + scratch


def conv_block_fwd(xs, p, *, final_softmax=False):
    if not isinstance(xs, (list, tuple)):
        xs = [xs]
    c_ins = [x.shape[-1] for x in xs]
    c_mid, c_out = p["w2"].shape[1], p["w2"].shape[-1]
    H, W = xs[0].shape[1], xs[0].shape[2]
    if _fused_vmem_estimate(c_ins, c_mid, c_out, H, W) <= _FUSE_VMEM_BUDGET:
        return conv_block_fused(list(xs), list(p["w1"]), p["b1"], p["w2"], p["b2"],
                                softmax=final_softmax)
    # large blocks (bottleneck / dec4 on small-VMEM parts): two tiled calls
    x = conv3x3_bn_act(list(xs), list(p["w1"]), p["b1"], relu=True)
    return conv3x3_bn_act([x], [p["w2"]], p["b2"], relu=True, softmax=final_softmax)


# ----------------------------------------------------------------------------
# ConvTranspose2d(kernel=4, stride=2, padding=1) kernel (4 output parities)
# ----------------------------------------------------------------------------
def _convt_kernel(x_ref, w_ref, b_ref, o_ref, *, offs, m):
    # x_ref: [Np, C_in] bf16; w_ref: [4, 4, C_in, tn] bf16; b_ref: [1, tn]; o: [4, m, tn]
    for par in range(4):                                 # output parity (ry, rx)
        acc = jnp.zeros((m, o_ref.shape[-1]), jnp.float32)
        for t in range(4):                               # 2x2 taps of this parity
            acc = acc + jnp.dot(x_ref[pl.ds(offs[par][t], m), :], w_ref[par, t],
                                preferred_element_type=jnp.float32)
        o_ref[par] = acc + b_ref[...]


def conv_transpose4x4_s2(x, wp, b):
    """x: [B, H, W, C_in]; wp: [4(parity), 4(tap), C_in, C_out] bf16 -> [B, 2H, 2W, C]."""
    B, H, W, C_in = x.shape
    C_out = wp.shape[-1]
    Wp2 = W + 2
    Np = (H + 3) * Wp2
    M = H * Wp2
    tn = _pick_tn(C_in, C_out, 16)
    assert C_out % tn == 0

    xp = _pad_slab(x, Np)
    offs = tuple(tuple((ry + ty) * Wp2 + (rx + tx) for ty in (0, 1) for tx in (0, 1))
                 for ry in (0, 1) for rx in (0, 1))
    kernel = functools.partial(_convt_kernel, offs=offs, m=M)
    out = pl.pallas_call(
        kernel,
        out_shape=jax.ShapeDtypeStruct((B, 4, M, C_out), jnp.float32),
        grid_spec=pltpu.PrefetchScalarGridSpec(
            num_scalar_prefetch=0,
            grid=(C_out // tn, B),
            in_specs=[
                pl.BlockSpec((None, Np, C_in), lambda j, bb: (bb, 0, 0)),
                pl.BlockSpec((4, 4, C_in, tn), lambda j, bb: (0, 0, 0, j)),
                pl.BlockSpec((1, tn), lambda j, bb: (0, j)),
            ],
            out_specs=pl.BlockSpec((None, 4, M, tn), lambda j, bb: (bb, 0, 0, j)),
        ),
        compiler_params=pltpu.CompilerParams(
            dimension_semantics=("parallel", "parallel"),
            vmem_limit_bytes=VMEM_LIMIT),
    )(xp, wp, b.reshape(1, C_out).astype(jnp.float32))
    # [B, 4(ry*2+rx), H*(W+2), C] -> interleave parities -> [B, 2H, 2W, C]
    out = out.reshape(B, 2, 2, H, Wp2, C_out)[:, :, :, :, :W, :]
    out = jnp.transpose(out, (0, 3, 1, 4, 2, 5)).reshape(B, 2 * H, 2 * W, C_out)
    return out


# ----------------------------------------------------------------------------
# Thin XLA glue (memory-bound reshuffles, intentionally not Pallas)
# ----------------------------------------------------------------------------
def maxpool2x2(x):  # NHWC, MaxPool2d(kernel=2, stride=2)
    a = jnp.maximum(x[:, 0::2, 0::2, :], x[:, 0::2, 1::2, :])
    b = jnp.maximum(x[:, 1::2, 0::2, :], x[:, 1::2, 1::2, :])
    return jnp.maximum(a, b)


# ----------------------------------------------------------------------------
# Parameter preparation (BN folding, bf16 weight re-layout)
# ----------------------------------------------------------------------------
def _reorder_conv3x3_w(w):
    # PyTorch [C_out, C_in, 3, 3] -> [9 (ky*3+kx), C_in, C_out]
    c_out, c_in = w.shape[0], w.shape[1]
    return jnp.transpose(w, (2, 3, 1, 0)).reshape(9, c_in, c_out)


def prep_conv3x3(w, b, gamma, beta, mean, var, eps=1e-5):
    # fold eval-mode BatchNorm into the conv: y = scale*(Wx + b - mean) + beta
    scale = gamma / jnp.sqrt(var + eps)
    wf = w * scale[:, None, None, None]
    bf = (b - mean) * scale + beta
    return _reorder_conv3x3_w(wf).astype(jnp.bfloat16), bf.astype(jnp.float32)


def prep_convT(w, b):
    # PyTorch ConvTranspose2d weight [C_in, C_out, 4, 4] -> [4(parity), 4(tap), C_in, C_out]
    # parity (ry, rx) of the output pixel; tap (ty, tx) reads padded input (y+ry+ty, x+rx+tx)
    # and uses kernel element (ky, kx) = (3 - ry - 2*ty, 3 - rx - 2*tx).
    mats = []
    for ry in (0, 1):
        for rx in (0, 1):
            sub = []
            for ty in (0, 1):
                for tx in (0, 1):
                    ky = 3 - ry - 2 * ty
                    kx = 3 - rx - 2 * tx
                    sub.append(w[:, :, ky, kx])          # [C_in, C_out]
            mats.append(jnp.stack(sub, 0))               # [4, C_in, C_out]
    return jnp.stack(mats, 0).astype(jnp.bfloat16), b.astype(jnp.float32)


def _init_bn(key, c):
    k1, k2, k3, k4 = jax.random.split(key, 4)
    gamma = 1.0 + 0.1 * jax.random.normal(k1, (c,), jnp.float32)
    beta = 0.1 * jax.random.normal(k2, (c,), jnp.float32)
    mean = 0.1 * jax.random.normal(k3, (c,), jnp.float32)
    var = 1.0 + 0.1 * jax.random.uniform(k4, (c,), jnp.float32)
    return gamma, beta, mean, var


def _init_conv_bn(key, c_in, c_out):
    kw, kb, kbn = jax.random.split(key, 3)
    w = jax.random.normal(kw, (c_out, c_in, 3, 3), jnp.float32) * (2.0 / (9 * c_in)) ** 0.5
    b = 0.01 * jax.random.normal(kb, (c_out,), jnp.float32)
    return prep_conv3x3(w, b, *_init_bn(kbn, c_out))


def init_conv_block_params(key, c_ins, c_out):
    k1, k2 = jax.random.split(key)
    w1, b1 = _init_conv_bn(k1, sum(c_ins), c_out)         # [9, sum(c_ins), c_out] bf16
    split_idx, s = [], 0
    for c in c_ins[:-1]:
        s += c
        split_idx.append(s)
    w1s = tuple(jnp.split(w1, split_idx, axis=1)) if split_idx else (w1,)
    w2, b2 = _init_conv_bn(k2, c_out, c_out)
    return {"w1": w1s, "b1": b1, "w2": w2, "b2": b2}


def init_up_params(key, c_in, c_out):
    kt, kb, kc = jax.random.split(key, 3)
    wt = jax.random.normal(kt, (c_in, c_out, 4, 4), jnp.float32) * (1.0 / (16 * c_in)) ** 0.5
    bt = 0.01 * jax.random.normal(kb, (c_out,), jnp.float32)
    wt_p, bt_p = prep_convT(wt, bt)
    p = init_conv_block_params(kc, [c_out, c_out], c_out)  # conv_block(2*out_chan, out_chan)
    p.update({"wt": wt_p, "bt": bt_p})
    return p


def init_unet_params(key, in_chan=3, out_chan=10, dino_chan=512):
    ks = jax.random.split(key, 10)
    return {
        "enc1": init_conv_block_params(ks[0], [in_chan], 64),
        "enc2": init_conv_block_params(ks[1], [64], 128),
        "enc3": init_conv_block_params(ks[2], [128], 256),
        "enc4": init_conv_block_params(ks[3], [256], 512),
        "bottle": init_conv_block_params(ks[4], [512, dino_chan], 1024),
        "dec4": init_up_params(ks[5], 1024, 512),
        "dec3": init_up_params(ks[6], 512, 256),
        "dec2": init_up_params(ks[7], 256, 128),
        "dec1": init_up_params(ks[8], 128, 64),
        "dec0": init_conv_block_params(ks[9], [64], out_chan),
    }


# ----------------------------------------------------------------------------
# Forward pass (matches unet.forward)
# ----------------------------------------------------------------------------
def up_fwd(x1, x2, p):
    x1u = conv_transpose4x4_s2(x1, p["wt"], p["bt"])
    return conv_block_fwd([x1u, x2], p)                  # concat-free (C_in-split weights)


def unet_fwd(params, xunet, xdino):
    x = jnp.transpose(xunet, (0, 2, 3, 1))               # NCHW -> NHWC, once
    xd = jnp.transpose(xdino, (0, 2, 3, 1))
    e1 = conv_block_fwd([x], params["enc1"])
    p1 = maxpool2x2(e1)
    e2 = conv_block_fwd([p1], params["enc2"])
    p2 = maxpool2x2(e2)
    e3 = conv_block_fwd([p2], params["enc3"])
    p3 = maxpool2x2(e3)
    e4 = conv_block_fwd([p3], params["enc4"])
    p4 = maxpool2x2(e4)
    xb = conv_block_fwd([p4, xd], params["bottle"])      # concat-free bottleneck input
    d4 = up_fwd(xb, e4, params["dec4"])
    d3 = up_fwd(d4, e3, params["dec3"])
    d2 = up_fwd(d3, e2, params["dec2"])
    d1 = up_fwd(d2, e1, params["dec1"])
    y = conv_block_fwd([d1], params["dec0"], final_softmax=True)   # softmax fused
    return jnp.transpose(y, (0, 3, 1, 2))                # NHWC -> NCHW, once


# ----------------------------------------------------------------------------
# Lightweight structural self-test against XLA convolutions
# ----------------------------------------------------------------------------
def _check_close(a, b, name, tol=5e-2):
    err = float(jnp.max(jnp.abs(a - b)))
    scale = max(1.0, float(jnp.max(jnp.abs(b))))
    assert err <= tol * scale, f"{name}: max_abs_err={err} (scale={scale})"


def _ref_conv3x3(x_nchw, w, b):
    return jax.lax.conv_general_dilated(
        x_nchw, w, (1, 1), ((1, 1), (1, 1)),
        dimension_numbers=("NCHW", "OIHW", "NCHW"),
        precision=jax.lax.Precision.HIGHEST) + b[None, :, None, None]


def _self_test():
    key = jax.random.PRNGKey(1)
    k1, k2, k3, k4, k5, k6, k7 = jax.random.split(key, 7)
    B, H, W, Ci, Cm, Co = 2, 8, 8, 16, 32, 32
    x = jax.random.normal(k1, (B, H, W, Ci), jnp.float32)
    x_nchw = jnp.transpose(x, (0, 3, 1, 2))

    # single 3x3 conv (unfused kernel)
    w = jax.random.normal(k2, (Co, Ci, 3, 3), jnp.float32) * 0.1
    b = 0.1 * jax.random.normal(k3, (Co,), jnp.float32)
    out = conv3x3_bn_act([x], [_reorder_conv3x3_w(w).astype(jnp.bfloat16)], b, relu=False)
    _check_close(jnp.transpose(out, (0, 3, 1, 2)), _ref_conv3x3(x_nchw, w, b), "conv3x3")

    # fused two-input conv_block (conv+ReLU -> conv+ReLU)
    x2 = jax.random.normal(k7, (B, H, W, Ci), jnp.float32)
    w1 = jax.random.normal(k4, (Cm, 2 * Ci, 3, 3), jnp.float32) * 0.1
    b1 = 0.1 * jax.random.normal(k5, (Cm,), jnp.float32)
    w2 = jax.random.normal(k6, (Co, Cm, 3, 3), jnp.float32) * 0.1
    b2 = 0.05 * jnp.ones((Co,), jnp.float32)
    w1s = tuple(jnp.split(_reorder_conv3x3_w(w1).astype(jnp.bfloat16), [Ci], axis=1))
    outf = conv_block_fused([x, x2], list(w1s), b1,
                            _reorder_conv3x3_w(w2).astype(jnp.bfloat16), b2)
    xcat = jnp.concatenate([x_nchw, jnp.transpose(x2, (0, 3, 1, 2))], axis=1)
    mid = jnp.maximum(_ref_conv3x3(xcat, w1, b1), 0.0)
    ref = jnp.maximum(_ref_conv3x3(mid, w2, b2), 0.0)
    _check_close(jnp.transpose(outf, (0, 3, 1, 2)), ref, "conv_block_fused")

    # ConvTranspose2d(k=4, s=2, p=1)
    wt = jax.random.normal(k4, (Ci, Co, 4, 4), jnp.float32) * 0.1
    bt = jnp.zeros((Co,), jnp.float32)
    wpar, _ = prep_convT(wt, bt)
    outt = conv_transpose4x4_s2(x, wpar, bt)
    wt_conv = jnp.transpose(wt[:, :, ::-1, ::-1], (1, 0, 2, 3))   # flip + [Co, Ci, 4, 4]
    reft = jax.lax.conv_general_dilated(
        x_nchw, wt_conv, (1, 1), ((2, 2), (2, 2)), lhs_dilation=(2, 2),
        dimension_numbers=("NCHW", "OIHW", "NCHW"),
        precision=jax.lax.Precision.HIGHEST)
    _check_close(jnp.transpose(outt, (0, 3, 1, 2)), reft, "conv_transpose4x4_s2")


# ----------------------------------------------------------------------------
if __name__ == "__main__":
    _self_test()

    B, in_chan, out_chan, H, W = 2, 3, 10, 32, 32
    key = jax.random.PRNGKey(0)
    kp, kx, kd = jax.random.split(key, 3)
    params = init_unet_params(kp, in_chan, out_chan)
    xunet = jax.random.normal(kx, (B, in_chan, H, W), jnp.float32)
    xdino = jax.random.normal(kd, (B, 512, H // 16, W // 16), jnp.float32)

    out = jax.jit(unet_fwd)(params, xunet, xdino)
    out = jax.block_until_ready(out)

    assert out.shape == (B, out_chan, H, W), out.shape
    assert bool(jnp.all(jnp.isfinite(out)))
    csum = jnp.sum(out, axis=1)                          # softmax over channels -> 1
    assert bool(jnp.all(jnp.abs(csum - 1.0) < 1e-3))
    print("KERNEL_OK")
</pallas_src>

<mosaic_0001>
module attributes {stable_mosaic.version = 11 : i64} {
  func.func @_conv3x3_kernel(%arg0: i32, %arg1: i32, %arg2: memref<1x110x16xbf16, #tpu.memory_space<vmem>>, %arg3: memref<9x16x32xbf16, #tpu.memory_space<vmem>>, %arg4: memref<1x32xf32, #tpu.memory_space<vmem>>, %arg5: memref<1x80x32xf32, #tpu.memory_space<vmem>>) attributes {dimension_semantics = [#tpu.dimension_semantics<parallel>, #tpu.dimension_semantics<parallel>], iteration_bounds = array<i64: 1, 2>, scalar_prefetch = 0 : i64, scratch_operands = 0 : i64, tpu.core_type = #tpu.core_type<tc>, window_params = [{transform_indices = @transform_0, window_bounds = array<i64: 1, 110, 16>}, {transform_indices = @transform_1, window_bounds = array<i64: 9, 16, 32>}, {transform_indices = @transform_2, window_bounds = array<i64: 1, 32>}, {transform_indices = @transform_3, window_bounds = array<i64: 1, 80, 32>}]} {
    %cst = arith.constant 0.000000e+00 : f32
    %0 = vector.broadcast %cst : f32 to vector<80x32xf32>
    %c0 = arith.constant 0 : index
    %c0_0 = arith.constant 0 : index
    %c0_1 = arith.constant 0 : index
    %1 = vector.load %arg2[%c0, %c0_0, %c0_1] : memref<1x110x16xbf16, #tpu.memory_space<vmem>>, vector<1x80x16xbf16>
    %2 = vector.shape_cast %1 : vector<1x80x16xbf16> to vector<80x16xbf16>
    %c0_2 = arith.constant 0 : index
    %c0_3 = arith.constant 0 : index
    %c0_4 = arith.constant 0 : index
    %3 = vector.load %arg3[%c0_2, %c0_3, %c0_4] : memref<9x16x32xbf16, #tpu.memory_space<vmem>>, vector<1x16x32xbf16>
    %4 = vector.shape_cast %3 : vector<1x16x32xbf16> to vector<16x32xbf16>
    %cst_5 = arith.constant dense<0.000000e+00> : vector<80x32xf32>
    %5 = tpu.matmul %2, %4, %cst_5 {dimension_numbers = #tpu.dot_dimension_numbers<[1], [0], [0], [1], [0, 0, 1, 1], [], []>} : vector<80x16xbf16>, vector<16x32xbf16>, vector<80x32xf32> -> vector<80x32xf32>
    %6 = arith.addf %0, %5 : vector<80x32xf32>
    %c0_6 = arith.constant 0 : index
    %c1 = arith.constant 1 : index
    %c0_7 = arith.constant 0 : index
    %7 = vector.load %arg2[%c0_6, %c1, %c0_7] : memref<1x110x16xbf16, #tpu.memory_space<vmem>>, vector<1x80x16xbf16>
    %8 = vector.shape_cast %7 : vector<1x80x16xbf16> to vector<80x16xbf16>
    %c1_8 = arith.constant 1 : index
    %c0_9 = arith.constant 0 : index
    %c0_10 = arith.constant 0 : index
    %9 = vector.load %arg3[%c1_8, %c0_9, %c0_10] : memref<9x16x32xbf16, #tpu.memory_space<vmem>>, vector<1x16x32xbf16>
    %10 = vector.shape_cast %9 : vector<1x16x32xbf16> to vector<16x32xbf16>
    %cst_11 = arith.constant dense<0.000000e+00> : vector<80x32xf32>
    %11 = tpu.matmul %8, %10, %cst_11 {dimension_numbers = #tpu.dot_dimension_numbers<[1], [0], [0], [1], [0, 0, 1, 1], [], []>} : vector<80x16xbf16>, vector<16x32xbf16>, vector<80x32xf32> -> vector<80x32xf32>
    %12 = arith.addf %6, %11 : vector<80x32xf32>
    %c0_12 = arith.constant 0 : index
    %c2 = arith.constant 2 : index
    %c0_13 = arith.constant 0 : index
    %13 = vector.load %arg2[%c0_12, %c2, %c0_13] : memref<1x110x16xbf16, #tpu.memory_space<vmem>>, vector<1x80x16xbf16>
    %14 = vector.shape_cast %13 : vector<1x80x16xbf16> to vector<80x16xbf16>
    %c2_14 = arith.constant 2 : index
    %c0_15 = arith.constant 0 : index
    %c0_16 = arith.constant 0 : index
    %15 = vector.load %arg3[%c2_14, %c0_15, %c0_16] : memref<9x16x32xbf16, #tpu.memory_space<vmem>>, vector<1x16x32xbf16>
    %16 = vector.shape_cast %15 : vector<1x16x32xbf16> to vector<16x32xbf16>
    %cst_17 = arith.constant dense<0.000000e+00> : vector<80x32xf32>
    %17 = tpu.matmul %14, %16, %cst_17 {dimension_numbers = #tpu.dot_dimension_numbers<[1], [0], [0], [1], [0, 0, 1, 1], [], []>} : vector<80x16xbf16>, vector<16x32xbf16>, vector<80x32xf32> -> vector<80x32xf32>
    %18 = arith.addf %12, %17 : vector<80x32xf32>
    %c0_18 = arith.constant 0 : index
    %c10 = arith.constant 10 : index
    %c0_19 = arith.constant 0 : index
    %19 = vector.load %arg2[%c0_18, %c10, %c0_19] : memref<1x110x16xbf16, #tpu.memory_space<vmem>>, vector<1x80x16xbf16>
    %20 = vector.shape_cast %19 : vector<1x80x16xbf16> to vector<80x16xbf16>
    %c3 = arith.constant 3 : index
    %c0_20 = arith.constant 0 : index
    %c0_21 = arith.constant 0 : index
    %21 = vector.load %arg3[%c3, %c0_20, %c0_21] : memref<9x16x32xbf16, #tpu.memory_space<vmem>>, vector<1x16x32xbf16>
    %22 = vector.shape_cast %21 : vector<1x16x32xbf16> to vector<16x32xbf16>
    %cst_22 = arith.constant dense<0.000000e+00> : vector<80x32xf32>
    %23 = tpu.matmul %20, %22, %cst_22 {dimension_numbers = #tpu.dot_dimension_numbers<[1], [0], [0], [1], [0, 0, 1, 1], [], []>} : vector<80x16xbf16>, vector<16x32xbf16>, vector<80x32xf32> -> vector<80x32xf32>
    %24 = arith.addf %18, %23 : vector<80x32xf32>
    %c0_23 = arith.constant 0 : index
    %c11 = arith.constant 11 : index
    %c0_24 = arith.constant 0 : index
    %25 = vector.load %arg2[%c0_23, %c11, %c0_24] : memref<1x110x16xbf16, #tpu.memory_space<vmem>>, vector<1x80x16xbf16>
    %26 = vector.shape_cast %25 : vector<1x80x16xbf16> to vector<80x16xbf16>
    %c4 = arith.constant 4 : index
    %c0_25 = arith.constant 0 : index
    %c0_26 = arith.constant 0 : index
    %27 = vector.load %arg3[%c4, %c0_25, %c0_26] : memref<9x16x32xbf16, #tpu.memory_space<vmem>>, vector<1x16x32xbf16>
    %28 = vector.shape_cast %27 : vector<1x16x32xbf16> to vector<16x32xbf16>
    %cst_27 = arith.constant dense<0.000000e+00> : vector<80x32xf32>
    %29 = tpu.matmul %26, %28, %cst_27 {dimension_numbers = #tpu.dot_dimension_numbers<[1], [0], [0], [1], [0, 0, 1, 1], [], []>} : vector<80x16xbf16>, vector<16x32xbf16>, vector<80x32xf32> -> vector<80x32xf32>
    %30 = arith.addf %24, %29 : vector<80x32xf32>
    %c0_28 = arith.constant 0 : index
    %c12 = arith.constant 12 : index
    %c0_29 = arith.constant 0 : index
    %31 = vector.load %arg2[%c0_28, %c12, %c0_29] : memref<1x110x16xbf16, #tpu.memory_space<vmem>>, vector<1x80x16xbf16>
    %32 = vector.shape_cast %31 : vector<1x80x16xbf16> to vector<80x16xbf16>
    %c5 = arith.constant 5 : index
    %c0_30 = arith.constant 0 : index
    %c0_31 = arith.constant 0 : index
    %33 = vector.load %arg3[%c5, %c0_30, %c0_31] : memref<9x16x32xbf16, #tpu.memory_space<vmem>>, vector<1x16x32xbf16>
    %34 = vector.shape_cast %33 : vector<1x16x32xbf16> to vector<16x32xbf16>
    %cst_32 = arith.constant dense<0.000000e+00> : vector<80x32xf32>
    %35 = tpu.matmul %32, %34, %cst_32 {dimension_numbers = #tpu.dot_dimension_numbers<[1], [0], [0], [1], [0, 0, 1, 1], [], []>} : vector<80x16xbf16>, vector<16x32xbf16>, vector<80x32xf32> -> vector<80x32xf32>
    %36 = arith.addf %30, %35 : vector<80x32xf32>
    %c0_33 = arith.constant 0 : index
    %c20 = arith.constant 20 : index
    %c0_34 = arith.constant 0 : index
    %37 = vector.load %arg2[%c0_33, %c20, %c0_34] : memref<1x110x16xbf16, #tpu.memory_space<vmem>>, vector<1x80x16xbf16>
    %38 = vector.shape_cast %37 : vector<1x80x16xbf16> to vector<80x16xbf16>
    %c6 = arith.constant 6 : index
    %c0_35 = arith.constant 0 : index
    %c0_36 = arith.constant 0 : index
    %39 = vector.load %arg3[%c6, %c0_35, %c0_36] : memref<9x16x32xbf16, #tpu.memory_space<vmem>>, vector<1x16x32xbf16>
    %40 = vector.shape_cast %39 : vector<1x16x32xbf16> to vector<16x32xbf16>
    %cst_37 = arith.constant dense<0.000000e+00> : vector<80x32xf32>
    %41 = tpu.matmul %38, %40, %cst_37 {dimension_numbers = #tpu.dot_dimension_numbers<[1], [0], [0], [1], [0, 0, 1, 1], [], []>} : vector<80x16xbf16>, vector<16x32xbf16>, vector<80x32xf32> -> vector<80x32xf32>
    %42 = arith.addf %36, %41 : vector<80x32xf32>
    %c0_38 = arith.constant 0 : index
    %c21 = arith.constant 21 : index
    %c0_39 = arith.constant 0 : index
    %43 = vector.load %arg2[%c0_38, %c21, %c0_39] : memref<1x110x16xbf16, #tpu.memory_space<vmem>>, vector<1x80x16xbf16>
    %44 = vector.shape_cast %43 : vector<1x80x16xbf16> to vector<80x16xbf16>
    %c7 = arith.constant 7 : index
    %c0_40 = arith.constant 0 : index
    %c0_41 = arith.constant 0 : index
    %45 = vector.load %arg3[%c7, %c0_40, %c0_41] : memref<9x16x32xbf16, #tpu.memory_space<vmem>>, vector<1x16x32xbf16>
    %46 = vector.shape_cast %45 : vector<1x16x32xbf16> to vector<16x32xbf16>
    %cst_42 = arith.constant dense<0.000000e+00> : vector<80x32xf32>
    %47 = tpu.matmul %44, %46, %cst_42 {dimension_numbers = #tpu.dot_dimension_numbers<[1], [0], [0], [1], [0, 0, 1, 1], [], []>} : vector<80x16xbf16>, vector<16x32xbf16>, vector<80x32xf32> -> vector<80x32xf32>
    %48 = arith.addf %42, %47 : vector<80x32xf32>
    %c0_43 = arith.constant 0 : index
    %c22 = arith.constant 22 : index
    %c0_44 = arith.constant 0 : index
    %49 = vector.load %arg2[%c0_43, %c22, %c0_44] : memref<1x110x16xbf16, #tpu.memory_space<vmem>>, vector<1x80x16xbf16>
    %50 = vector.shape_cast %49 : vector<1x80x16xbf16> to vector<80x16xbf16>
    %c8 = arith.constant 8 : index
    %c0_45 = arith.constant 0 : index
    %c0_46 = arith.constant 0 : index
    %51 = vector.load %arg3[%c8, %c0_45, %c0_46] : memref<9x16x32xbf16, #tpu.memory_space<vmem>>, vector<1x16x32xbf16>
    %52 = vector.shape_cast %51 : vector<1x16x32xbf16> to vector<16x32xbf16>
    %cst_47 = arith.constant dense<0.000000e+00> : vector<80x32xf32>
    %53 = tpu.matmul %50, %52, %cst_47 {dimension_numbers = #tpu.dot_dimension_numbers<[1], [0], [0], [1], [0, 0, 1, 1], [], []>} : vector<80x16xbf16>, vector<16x32xbf16>, vector<80x32xf32> -> vector<80x32xf32>
    %54 = arith.addf %48, %53 : vector<80x32xf32>
    %c0_48 = arith.constant 0 : index
    %c0_49 = arith.constant 0 : index
    %55 = vector.load %arg4[%c0_48, %c0_49] : memref<1x32xf32, #tpu.memory_space<vmem>>, vector<1x32xf32>
    %56 = vector.broadcast %55 : vector<1x32xf32> to vector<80x32xf32>
    %57 = arith.addf %54, %56 : vector<80x32xf32>
    %c0_50 = arith.constant 0 : index
    %c0_51 = arith.constant 0 : index
    %c0_52 = arith.constant 0 : index
    %58 = vector.load %arg5[%c0_50, %c0_51, %c0_52] : memref<1x80x32xf32, #tpu.memory_space<vmem>>, vector<1x80x32xf32>
    %59 = vector.shape_cast %58 : vector<1x80x32xf32> to vector<80x32xf32>
    %60 = vector.shape_cast %57 : vector<80x32xf32> to vector<1x80x32xf32>
    tpu.vector_store %arg5[%c0_50, %c0_51, %c0_52], %60 {strides = array<i32>} : memref<1x80x32xf32, #tpu.memory_space<vmem>>, vector<1x80x32xf32>,
    return
  }
  func.func @transform_0(%arg0: i32, %arg1: i32) -> (i32, i32, i32) {
    %c0_i32 = arith.constant 0 : i32
    %c0_i32_0 = arith.constant 0 : i32
    %c0_i32_1 = arith.constant 0 : i32
    return %arg1, %c0_i32, %c0_i32_0 : i32, i32, i32
  }
  func.func @transform_1(%arg0: i32, %arg1: i32) -> (i32, i32, i32) {
    %c0_i32 = arith.constant 0 : i32
    %c0_i32_0 = arith.constant 0 : i32
    %c0_i32_1 = arith.constant 0 : i32
    return %c0_i32, %c0_i32_0, %arg0 : i32, i32, i32
  }
  func.func @transform_2(%arg0: i32, %arg1: i32) -> (i32, i32) {
    %c0_i32 = arith.constant 0 : i32
    %c0_i32_0 = arith.constant 0 : i32
    return %c0_i32, %arg0 : i32, i32
  }
  func.func @transform_3(%arg0: i32, %arg1: i32) -> (i32, i32, i32) {
    %c0_i32 = arith.constant 0 : i32
    %c0_i32_0 = arith.constant 0 : i32
    return %arg1, %c0_i32, %arg0 : i32, i32, i32
  }
}

</mosaic_0001>

<llo_original>
// kernel: tpu_custom_call.1
$region0: #{tpu_custom_call.1}
  #allocation0 [shape = 'u32[]', space=smem, size = 0x4, offset = 0x4, fixed_abs, tag = 'smem constant byte address 0x4 - core index']
  #allocation1 [shape = 'u32[144,128]{1,0:T(1,128)}', space=vmem, size = 0x12000, scoped, tag = 'internal scratch']
  %s0 = inlined_call_operand.vmem [shape: bf16[2,110,16], index: 0, kind: input, shape index: {}]
  %s1 = inlined_call_operand.vmem [shape: bf16[9,16,32], index: 1, kind: input, shape index: {}]
  %s2 = inlined_call_operand.vmem [shape: f32[1,32], index: 2, kind: input, shape index: {}]
  %s3 = inlined_call_operand.vmem [shape: f32[2,80,32], index: 3, kind: output, shape index: {}]
  %s4 = sld [smem:[#allocation0]]
  $region45: #{tpu_custom_call.1} parent=0
    _
  %s6 = ssub.s32 1, %s4
  %s7 = scalar_select 0, %s6, %s4
  loop: start=0, step=1, limit=4
  $region2: #{tpu_custom_call.1} parent=0 // loop_pre_header
    _
  $region3: #{tpu_custom_call.1} parent=0 // loop_header
    %s9 = sphi 0, %s13
    %p10 = scmp.ge.s32.totalorder %s9, 4
    %s16 = sphi 0, %s28
    %s17 = sphi 0, %s24
    %s18 = sphi 0, %s16
    %s19 = sphi 0, %s17
    %s20 = sphi 0, %s18
    %s21 = sphi 0, %s19
    %s31 = sphi 0, %s33
    %s34 = sphi 0, %s31
    %s35 = sphi 0, %s34
    %s51 = sphi 0, %s35
    %s57 = sphi 0, %s59
    %s60 = sphi 0, %s57
    %s61 = sphi 0, %s60
    %s77 = sphi 0, %s61
    %s83 = sphi 0, %s85
    %s86 = sphi 0, %s83
    %s87 = sphi 0, %s86
    %s103 = sphi 0, %s87
    %s111 = sphi 0, %s113
    %s114 = sphi 0, %s111
    %s115 = sphi 0, %s114
    %s131 = sphi 0, %s115
  $region4: #{tpu_custom_call.1} parent=0 // loop_header_branch
    %12 = sbr.rel (%p10) target = $region8
  $region5: #{tpu_custom_call.1} parent=0 // loop_body
    %s14 = ssub.s32 %s9, 1
    %s15 = ssub.s32 %s9, 2
    %s22 = sadd.s32 1, %s17
    %p23 = scmp.ge.s32.totalorder %s22, 2
    %s24 = scalar_select %p23, 0, %s22
    %s25 = sadd.s32 1, %s16
    %s26 = scalar_select %p23, %s25, %s16
    %p27 = scmp.ge.s32.totalorder %s26, 1
    %s28 = scalar_select %p27, 0, %s26
    %s29 = ssub.s32 %s17, %s24
    %p30 = scmp.eq.s32.totalorder %s29, 0
    %s32 = sadd.s32 %s31, 1
    %s33 = scalar_select %p30, %s31, %s32
    %p36 = pneg %p30
    %p37 = scmp.eq.s32.totalorder %s9, 1
    %p38 = por %p36, %p37
    %p39 = scmp.ne.s32.totalorder %s31, %s34
    %p40 = scmp.eq.s32.totalorder %s9, 0
    %p41 = por %p39, %p40
    %p42 = scmp.ne.s32.totalorder %s31, %s34
    %p43 = scmp.eq.s32.totalorder %s14, 1
    %p44 = por %p42, %p43
    %p45 = scmp.ne.s32.totalorder %s34, %s35
    %p46 = scmp.eq.s32.totalorder %s14, 0
    %p47 = por %p45, %p46
    %p48 = scmp.ne.s32.totalorder %s34, %s35
    %p49 = scmp.eq.s32.totalorder %s15, 1
    %p50 = por %p48, %p49
    %p52 = scmp.ne.s32.totalorder %s35, %s51
    %p53 = scmp.eq.s32.totalorder %s15, 0
    %p54 = por %p52, %p53
    %s55 = ssub.s32 %s16, %s28
    %p56 = scmp.eq.s32.totalorder %s55, 0
    %s58 = sadd.s32 %s57, 1
    %s59 = scalar_select %p56, %s57, %s58
    %p62 = pneg %p56
    %p63 = scmp.eq.s32.totalorder %s9, 1
    %p64 = por %p62, %p63
    %p65 = scmp.ne.s32.totalorder %s57, %s60
    %p66 = scmp.eq.s32.totalorder %s9, 0
    %p67 = por %p65, %p66
    %p68 = scmp.ne.s32.totalorder %s57, %s60
    %p69 = scmp.eq.s32.totalorder %s14, 1
    %p70 = por %p68, %p69
    %p71 = scmp.ne.s32.totalorder %s60, %s61
    %p72 = scmp.eq.s32.totalorder %s14, 0
    %p73 = por %p71, %p72
    %p74 = scmp.ne.s32.totalorder %s60, %s61
    %p75 = scmp.eq.s32.totalorder %s15, 1
    %p76 = por %p74, %p75
    %p78 = scmp.ne.s32.totalorder %s61, %s77
    %p79 = scmp.eq.s32.totalorder %s15, 0
    %p80 = por %p78, %p79
    %s81 = ssub.s32 %s16, %s28
    %p82 = scmp.eq.s32.totalorder %s81, 0
    %s84 = sadd.s32 %s83, 1
    %s85 = scalar_select %p82, %s83, %s84
    %p88 = pneg %p82
    %p89 = scmp.eq.s32.totalorder %s9, 1
    %p90 = por %p88, %p89
    %p91 = scmp.ne.s32.totalorder %s83, %s86
    %p92 = scmp.eq.s32.totalorder %s9, 0
    %p93 = por %p91, %p92
    %p94 = scmp.ne.s32.totalorder %s83, %s86
    %p95 = scmp.eq.s32.totalorder %s14, 1
    %p96 = por %p94, %p95
    %p97 = scmp.ne.s32.totalorder %s86, %s87
    %p98 = scmp.eq.s32.totalorder %s14, 0
    %p99 = por %p97, %p98
    %p100 = scmp.ne.s32.totalorder %s86, %s87
    %p101 = scmp.eq.s32.totalorder %s15, 1
    %p102 = por %p100, %p101
    %p104 = scmp.ne.s32.totalorder %s87, %s103
    %p105 = scmp.eq.s32.totalorder %s15, 0
    %p106 = por %p104, %p105
    %s107 = ssub.s32 %s17, %s24
    %s108 = ssub.s32 %s16, %s28
    %s109 = sor.u32 %s107, %s108
    %p110 = scmp.eq.s32.totalorder %s109, 0
    %s112 = sadd.s32 %s111, 1
    %s113 = scalar_select %p110, %s111, %s112
    %p116 = pneg %p110
    %p117 = scmp.eq.s32.totalorder %s9, 1
    %p118 = por %p116, %p117
    %p119 = scmp.ne.s32.totalorder %s111, %s114
    %p120 = scmp.eq.s32.totalorder %s9, 0
    %p121 = por %p119, %p120
    %p122 = scmp.ne.s32.totalorder %s111, %s114
    %p123 = scmp.eq.s32.totalorder %s14, 1
    %p124 = por %p122, %p123
    %p125 = scmp.ne.s32.totalorder %s114, %s115
    %p126 = scmp.eq.s32.totalorder %s14, 0
    %p127 = por %p125, %p126
    %p128 = scmp.ne.s32.totalorder %s114, %s115
    %p129 = scmp.eq.s32.totalorder %s15, 1
    %p130 = por %p128, %p129
    %p132 = scmp.ne.s32.totalorder %s115, %s131
    %p133 = scmp.eq.s32.totalorder %s15, 0
    %p134 = por %p132, %p133
    %p135 = scmp.le.s32.totalorder 1, %s9
    %p136 = scmp.lt.s32.totalorder %s9, 3
    %p137 = pnand %p135, %p136
    %p138 = pneg %p137
    // Predicated region
    $region9: #{tpu_custom_call.1} parent=5 // pred_check
      _
    $region10: #{tpu_custom_call.1} parent=5 // pred_check_branch
      %140 = sbr.rel (%p137) target = $region12
    $region11: #{tpu_custom_call.1} parent=5 // pred_region
      %s141 = ssub.s32 %s9, 1
      // Predicated region
      $region13: #{tpu_custom_call.1} parent=11 // pred_check
        %p142 = pneg %p73
      $region14: #{tpu_custom_call.1} parent=11 // pred_check_branch
        %144 = sbr.rel (%p142) target = $region16
      $region15: #{tpu_custom_call.1} parent=11 // pred_region
        %p145 = scmp.lt.s32.totalorder %s18, 0
        %s146 = scalar_select %p145, %s18, 0
        %s147 = smul.addr %s146, 4
        %s148 = scalar_lea.vmem %s1, %s147
      $region16: #{tpu_custom_call.1} parent=11 // pred_fallthru
        _
      // Predicated region
      $region17: #{tpu_custom_call.1} parent=11 // pred_check
        %p149 = pneg %p99
      $region18: #{tpu_custom_call.1} parent=11 // pred_check_branch
        %151 = sbr.rel (%p149) target = $region20
      $region19: #{tpu_custom_call.1} parent=11 // pred_region
        %p152 = scmp.lt.s32.totalorder %s18, 0
        %s153 = scalar_select %p152, %s18, 0
        %s154 = scalar_lea.vmem %s2, %s153
      $region20: #{tpu_custom_call.1} parent=11 // pred_fallthru
        _
    $region12: #{tpu_custom_call.1} parent=5 // pred_fallthru
      _
    %p155 = scmp.lt.s32.totalorder %s9, 2
    // Predicated region
    $region21: #{tpu_custom_call.1} parent=5 // pred_check
      %p156 = pneg %p155
    $region22: #{tpu_custom_call.1} parent=5 // pred_check_branch
      %158 = sbr.rel (%p156) target = $region24
    $region23: #{tpu_custom_call.1} parent=5 // pred_region
      // Predicated region
      $region25: #{tpu_custom_call.1} parent=23 // pred_check
        %p159 = pneg %p41
      $region26: #{tpu_custom_call.1} parent=23 // pred_check_branch
        %161 = sbr.rel (%p159) target = $region28
      $region27: #{tpu_custom_call.1} parent=23 // pred_region
        %p162 = scmp.lt.s32.totalorder %s17, 1
        %s163 = scalar_select %p162, %s17, 1
        %s164 = smul.addr %s163, 14
        %s165 = smul.addr %s164, 4
        %s166 = scalar_lea.vmem %s0, %s165
      $region28: #{tpu_custom_call.1} parent=23 // pred_fallthru
        _
    $region24: #{tpu_custom_call.1} parent=5 // pred_fallthru
      _
    %p167 = scmp.le.s32.totalorder 1, %s9
    %p168 = scmp.lt.s32.totalorder %s9, 3
    %p169 = pnand %p167, %p168
    %p170 = pneg %p169
    // Predicated region
    $region29: #{tpu_custom_call.1} parent=5 // pred_check
      _
    $region30: #{tpu_custom_call.1} parent=5 // pred_check_branch
      %172 = sbr.rel (%p169) target = $region32
    $region31: #{tpu_custom_call.1} parent=5 // pred_region
      %s173 = ssub.s32 %s9, 1
      %p174 = scmp.lt.s32.totalorder %s19, 1
      %s175 = scalar_select %p174, %s19, 1
      %s176 = smul.addr %s175, 14
      %s177 = smul.addr %s176, 4
      %s178 = scalar_lea.vmem %s0, %s177
      %p179 = pneg %p47
      %p180 = pneg %p44
      %p181 = scmp.lt.s32.totalorder %s18, 0
      %s182 = scalar_select %p181, %s18, 0
      %s183 = smul.addr %s182, 4
      %s184 = scalar_lea.vmem %s1, %s183
      %p185 = pneg %p73
      %p186 = pneg %p70
      %p187 = scmp.lt.s32.totalorder %s18, 0
      %s188 = scalar_select %p187, %s18, 0
      %s189 = scalar_lea.vmem %s2, %s188
      %p190 = pneg %p99
      %p191 = pneg %p96
      %p192 = pneg %p127
      %p193 = pneg %p124
      %p194 = scmp.lt.s32.totalorder %s19, 1
      %s195 = scalar_select %p194, %s19, 1
      %p196 = scmp.lt.s32.totalorder %s18, 0
      %s197 = scalar_select %p196, %s18, 0
      %s198 = smul.addr %s195, 10
      %s199 = sadd.s32 %s197, %s198
      %s200 = smul.addr %s199, 8
      %s201 = scalar_lea.vmem %s3, %s200
      %p202 = scmp.lt.s32.totalorder %s19, 1
      %s203 = scalar_select %p202, %s19, 1
      %s204 = smul.addr %s203, 14
      %s205 = smul.addr %s204, 4
      %s206 = scalar_lea.vmem %s0, %s205
      %p207 = scmp.lt.s32.totalorder %s18, 0
      %s208 = scalar_select %p207, %s18, 0
      %s209 = smul.addr %s208, 4
      %s210 = scalar_lea.vmem %s1, %s209
      %p211 = scmp.lt.s32.totalorder %s18, 0
      %s212 = scalar_select %p211, %s18, 0
      %s213 = scalar_lea.vmem %s2, %s212
      %p214 = scmp.lt.s32.totalorder %s19, 1
      %s215 = scalar_select %p214, %s19, 1
      %p216 = scmp.lt.s32.totalorder %s18, 0
      %s217 = scalar_select %p216, %s18, 0
      %s218 = smul.addr %s215, 10
      %s219 = sadd.s32 %s217, %s218
      %s220 = smul.addr %s219, 8
      %s221 = scalar_lea.vmem %s3, %s220
      %v223 = vld [vmem:[%s206] sm:$0xf]
      %v224 = vld [vmem:[%s206 + $0x4] sm:$0xf]
      %v225 = vld [vmem:[%s206 + $0x8] sm:$0xf]
      %v226 = vld [vmem:[%s206 + $0xc] sm:$0xf]
      %v227 = vld [vmem:[%s206 + $0x10] sm:$0xf]
      %v228 = vld [vmem:[%s206 + $0x14] sm:$0xf]
      %v229 = vld [vmem:[%s206 + $0x18] sm:$0xf]
      %v230 = vld [vmem:[%s206 + $0x1c] sm:$0xf]
      %v231 = vld [vmem:[%s206 + $0x20] sm:$0xf]
      %v232 = vld [vmem:[%s206 + $0x24] sm:$0xf]
      %v233 = vld [vmem:[%s210] sm:$0xf]
      %v234 = vld [vmem:[%s210 + $0x4] sm:$0xf]
      %v235 = vld [vmem:[%s206 + $0x28] sm:$0x1]
      %s236 = scalar_lea.vmem %s210, 8
      %v237 = vld [vmem:[%s236] sm:$0xf]
      %v238 = vld [vmem:[%s236 + $0x4] sm:$0xf]
      %v250 = vunpack.c.l.b16 %v223
      %v251 = vunpack.c.l.b16 %v224
      %v252 = vunpack.c.l.b16 %v225
      %v253 = vunpack.c.l.b16 %v226
      %v254 = vunpack.c.l.b16 %v227
      %v255 = vunpack.c.l.b16 %v228
      %v256 = vunpack.c.l.b16 %v229
      %v257 = vunpack.c.l.b16 %v230
      %v258 = vunpack.c.l.b16 %v231
      %v259 = vunpack.c.l.b16 %v232
      %v260 = vunpack.c.l.b16 %v235
      %v261 = vpack.c.b16 %v251, %v250
      %v262 = vpack.c.b16 %v253, %v252
      %v263 = vpack.c.b16 %v255, %v254
      %v264 = vpack.c.b16 %v257, %v256
      %v265 = vpack.c.b16 %v259, %v258
      %v266 = vpack.c.b16 %v260, %v260
      %vm267 = vsmask.f32 7424
      %v269 = vshrl.u32 %v261, 16
      %v271 = vshll.u32 %v261, 16
      %v273 = vrot.slane %v271, 1
      %v274 = vor.u32 %v269, %v273
      %v276 = vshll.u32 %v262, 16
      %v278 = vrot.slane %v276, 1
      %v279 = vsel %vm267, %v274, %v278
      %v280 = vshrl.u32 %v262, 16
      %v282 = vor.u32 %v280, %v278
      %v284 = vshll.u32 %v263, 16
      %v286 = vrot.slane %v284, 1
      %v287 = vsel %vm267, %v282, %v286
      %v288 = vshrl.u32 %v263, 16
      %v290 = vor.u32 %v288, %v286
      %v292 = vshll.u32 %v264, 16
      %v294 = vrot.slane %v292, 1
      %v295 = vsel %vm267, %v290, %v294
      %v296 = vshrl.u32 %v264, 16
      %v298 = vor.u32 %v296, %v294
      %v300 = vshll.u32 %v265, 16
      %v302 = vrot.slane %v300, 1
      %v303 = vsel %vm267, %v298, %v302
      %v304 = vshrl.u32 %v265, 16
      %v306 = vor.u32 %v304, %v302
      %v308 = vshll.u32 %v266, 16
      %v310 = vrot.slane %v308, 1
      %v311 = vsel %vm267, %v306, %v310
      %v314 = vunpack.c.l.b16 %v237
      %v315 = vunpack.c.l.b16 %v238
      %v316 = vpack.c.b16 %v315, %v314
      %vm318 = vcmask 130048
      %v320 = vsel %vm318, %v279, 0
      %v323 = vsel %vm318, %v287, 0
      %v326 = vsel %vm318, %v295, 0
      %v329 = vsel %vm318, %v303, 0
      %v332 = vsel %vm318, %v311, 0
      %334 = vmatprep.subr.bf16.mxu0 0
      %335 = vmatpush1.bf16.msra.mxu0 %v316
      %336 = vmatprep.subr.bf16.mxu0 0
      %337 = vmatpush1.bf16.msra.mxu0 0
      %338 = vmatprep.subr.bf16.mxu0 0
      %339 = vmatpush1.bf16.msra.mxu0 0
      %340 = vmatprep.subr.bf16.mxu0 0
      %341 = vmatpush1.bf16.msra.mxu0 0
      %342 = vmatprep.subr.bf16.mxu0 0
      %343 = vmatpush1.bf16.msra.mxu0 0
      %344 = vmatprep.subr.bf16.mxu0 0
      %345 = vmatpush1.bf16.msra.mxu0 0
      %346 = vmatprep.subr.bf16.mxu0 0
      %347 = vmatpush1.bf16.msra.mxu0 0
      %348 = vmatprep.subr.bf16.mxu0 0
      %349 = vmatpush1.bf16.msra.mxu0 0
      %350 = vmatprep.subr.bf16.mxu0 0
      %351 = vmatpush1.bf16.msra.mxu0 0
      %352 = vmatprep.subr.bf16.mxu0 0
      %353 = vmatpush1.bf16.msra.mxu0 0
      %354 = vmatprep.subr.bf16.mxu0 0
      %355 = vmatpush1.bf16.msra.mxu0 0
      %356 = vmatprep.subr.bf16.mxu0 0
      %357 = vmatpush1.bf16.msra.mxu0 0
      %358 = vmatprep.subr.bf16.mxu0 0
      %359 = vmatpush1.bf16.msra.mxu0 0
      %360 = vmatprep.subr.bf16.mxu0 0
      %361 = vmatpush1.bf16.msra.mxu0 0
      %362 = vmatprep.subr.bf16.mxu0 0
      %363 = vmatpush1.bf16.msra.mxu0 0
      %364 = vmatprep.subr.bf16.mxu0 0
      %365 = vmatpush1.bf16.msra.mxu0 0
      %366 = vmatprep.mubr.bf16.mxu0 0
      %367 = vmatmul.mubr.bf16.gmra.mrb[0].mxu0 %v320
      %v368 = vpop.f32.mrb[0].mxu0
      %v369 = vadd.f32 0.0, %v368
      %v370 = vpop.f32.mrb[0].mxu0
      %v371 = vpop.f32.mrb[0].mxu0
      %v372 = vadd.f32 0.0, %v371
      %v373 = vpop.f32.mrb[0].mxu0
      %374 = vmatprep.mubr.bf16.mxu0 0
      %375 = vmatmul.mubr.bf16.gmra.mrb[0].mxu0 %v323
      %v376 = vpop.f32.mrb[0].mxu0
      %v377 = vadd.f32 0.0, %v376
      %v378 = vpop.f32.mrb[0].mxu0
      %v379 = vpop.f32.mrb[0].mxu0
      %v380 = vadd.f32 0.0, %v379
      %v381 = vpop.f32.mrb[0].mxu0
      %382 = vmatprep.mubr.bf16.mxu0 0
      %383 = vmatmul.mubr.bf16.gmra.mrb[0].mxu0 %v326
      %v384 = vpop.f32.mrb[0].mxu0
      %v385 = vadd.f32 0.0, %v384
      %v386 = vpop.f32.mrb[0].mxu0
      %v387 = vpop.f32.mrb[0].mxu0
      %v388 = vadd.f32 0.0, %v387
      %v389 = vpop.f32.mrb[0].mxu0
      %390 = vmatprep.mubr.bf16.mxu0 0
      %391 = vmatmul.mubr.bf16.gmra.mrb[0].mxu0 %v329
      %v392 = vpop.f32.mrb[0].mxu0
      %v393 = vadd.f32 0.0, %v392
      %v394 = vpop.f32.mrb[0].mxu0
      %v395 = vpop.f32.mrb[0].mxu0
      %v396 = vadd.f32 0.0, %v395
      %v397 = vpop.f32.mrb[0].mxu0
      %398 = vmatprep.mubr.bf16.mxu0 0
      %399 = vmatmul.mubr.bf16.gmra.mrb[0].mxu0 %v332
      %v400 = vpop.f32.mrb[0].mxu0
      %v401 = vadd.f32 0.0, %v400
      %v402 = vpop.f32.mrb[0].mxu0
      %v403 = vpop.f32.mrb[0].mxu0
      %v404 = vadd.f32 0.0, %v403
      %v405 = vpop.f32.mrb[0].mxu0
      %406 = vdwg.mxu0
      %v409 = vunpack.c.l.b16 %v233
      %v410 = vunpack.c.l.b16 %v234
      %v411 = vpack.c.b16 %v410, %v409
      %v413 = vsel %vm318, %v261, 0
      %v415 = vsel %vm318, %v262, 0
      %v417 = vsel %vm318, %v263, 0
      %v419 = vsel %vm318, %v264, 0
      %v421 = vsel %vm318, %v265, 0
      %423 = vmatprep.subr.bf16.mxu0 0
      %424 = vmatpush1.bf16.msra.mxu0 %v411
      %425 = vmatprep.subr.bf16.mxu0 0
      %426 = vmatpush1.bf16.msra.mxu0 0
      %427 = vmatprep.subr.bf16.mxu0 0
      %428 = vmatpush1.bf16.msra.mxu0 0
      %429 = vmatprep.subr.bf16.mxu0 0
      %430 = vmatpush1.bf16.msra.mxu0 0
      %431 = vmatprep.subr.bf16.mxu0 0
      %432 = vmatpush1.bf16.msra.mxu0 0
      %433 = vmatprep.subr.bf16.mxu0 0
      %434 = vmatpush1.bf16.msra.mxu0 0
      %435 = vmatprep.subr.bf16.mxu0 0
      %436 = vmatpush1.bf16.msra.mxu0 0
      %437 = vmatprep.subr.bf16.mxu0 0
      %438 = vmatpush1.bf16.msra.mxu0 0
      %439 = vmatprep.subr.bf16.mxu0 0
      %440 = vmatpush1.bf16.msra.mxu0 0
      %441 = vmatprep.subr.bf16.mxu0 0
      %442 = vmatpush1.bf16.msra.mxu0 0
      %443 = vmatprep.subr.bf16.mxu0 0
      %444 = vmatpush1.bf16.msra.mxu0 0
      %445 = vmatprep.subr.bf16.mxu0 0
      %446 = vmatpush1.bf16.msra.mxu0 0
      %447 = vmatprep.subr.bf16.mxu0 0
      %448 = vmatpush1.bf16.msra.mxu0 0
      %449 = vmatprep.subr.bf16.mxu0 0
      %450 = vmatpush1.bf16.msra.mxu0 0
      %451 = vmatprep.subr.bf16.mxu0 0
      %452 = vmatpush1.bf16.msra.mxu0 0
      %453 = vmatprep.subr.bf16.mxu0 0
      %454 = vmatpush1.bf16.msra.mxu0 0
      %455 = vmatprep.mubr.bf16.mxu0 0
      %456 = vmatmul.mubr.bf16.gmra.mrb[0].mxu0 %v413
      %v457 = vpop.f32.mrb[0].mxu0
      %v458 = vadd.f32 %v369, %v457
      %v459 = vpop.f32.mrb[0].mxu0
      %v460 = vpop.f32.mrb[0].mxu0
      %v461 = vadd.f32 %v372, %v460
      %v462 = vpop.f32.mrb[0].mxu0
      %463 = vmatprep.mubr.bf16.mxu0 0
      %464 = vmatmul.mubr.bf16.gmra.mrb[0].mxu0 %v415
      %v465 = vpop.f32.mrb[0].mxu0
      %v466 = vadd.f32 %v377, %v465
      %v467 = vpop.f32.mrb[0].mxu0
      %v468 = vpop.f32.mrb[0].mxu0
      %v469 = vadd.f32 %v380, %v468
      %v470 = vpop.f32.mrb[0].mxu0
      %471 = vmatprep.mubr.bf16.mxu0 0
      %472 = vmatmul.mubr.bf16.gmra.mrb[0].mxu0 %v417
      %v473 = vpop.f32.mrb[0].mxu0
      %v474 = vadd.f32 %v385, %v473
      %v475 = vpop.f32.mrb[0].mxu0
      %v476 = vpop.f32.mrb[0].mxu0
      %v477 = vadd.f32 %v388, %v476
      %v478 = vpop.f32.mrb[0].mxu0
      %479 = vmatprep.mubr.bf16.mxu0 0
      %480 = vmatmul.mubr.bf16.gmra.mrb[0].mxu0 %v419
      %v481 = vpop.f32.mrb[0].mxu0
      %v482 = vadd.f32 %v393, %v481
      %v483 = vpop.f32.mrb[0].mxu0
      %v484 = vpop.f32.mrb[0].mxu0
      %v485 = vadd.f32 %v396, %v484
      %v486 = vpop.f32.mrb[0].mxu0
      %487 = vmatprep.mubr.bf16.mxu0 0
      %488 = vmatmul.mubr.bf16.gmra.mrb[0].mxu0 %v421
      %v489 = vpop.f32.mrb[0].mxu0
      %v490 = vadd.f32 %v401, %v489
      %v491 = vpop.f32.mrb[0].mxu0
      %v492 = vpop.f32.mrb[0].mxu0
      %v493 = vadd.f32 %v404, %v492
      %v494 = vpop.f32.mrb[0].mxu0
      %495 = vdwg.mxu0
      %v496 = vld [vmem:[%s206] sm:$0xe]
      %s497 = scalar_lea.vmem %s210, 16
      %v498 = vld [vmem:[%s497] sm:$0xf]
      %v499 = vld [vmem:[%s497 + $0x4] sm:$0xf]
      %v501 = vunpack.c.l.b16 %v496
      %v502 = vpack.c.b16 %v251, %v501
      %vm503 = vcmask 1046528
      %v504 = vrot.slane %v502, 1
      %v505 = vrot.slane %v262, 1
      %v506 = vsel %vm503, %v504, %v505
      %v507 = vrot.slane %v263, 1
      %v508 = vsel %vm503, %v505, %v507
      %v509 = vrot.slane %v264, 1
      %v510 = vsel %vm503, %v507, %v509
      %v511 = vrot.slane %v265, 1
      %v512 = vsel %vm503, %v509, %v511
      %v513 = vrot.slane %v266, 1
      %v514 = vsel %vm503, %v511, %v513
      %v517 = vunpack.c.l.b16 %v498
      %v518 = vunpack.c.l.b16 %v499
      %v519 = vpack.c.b16 %v518, %v517
      %v522 = vsel %vm318, %v506, 0
      %v525 = vsel %vm318, %v508, 0
      %v528 = vsel %vm318, %v510, 0
      %v531 = vsel %vm318, %v512, 0
      %v534 = vsel %vm318, %v514, 0
      %536 = vmatprep.subr.bf16.mxu0 0
      %537 = vmatpush1.bf16.msra.mxu0 %v519
      %538 = vmatprep.subr.bf16.mxu0 0
      %539 = vmatpush1.bf16.msra.mxu0 0
      %540 = vmatprep.subr.bf16.mxu0 0
      %541 = vmatpush1.bf16.msra.mxu0 0
      %542 = vmatprep.subr.bf16.mxu0 0
      %543 = vmatpush1.bf16.msra.mxu0 0
      %544 = vmatprep.subr.bf16.mxu0 0
      %545 = vmatpush1.bf16.msra.mxu0 0
      %546 = vmatprep.subr.bf16.mxu0 0
      %547 = vmatpush1.bf16.msra.mxu0 0
      %548 = vmatprep.subr.bf16.mxu0 0
      %549 = vmatpush1.bf16.msra.mxu0 0
      %550 = vmatprep.subr.bf16.mxu0 0
      %551 = vmatpush1.bf16.msra.mxu0 0
      %552 = vmatprep.subr.bf16.mxu0 0
      %553 = vmatpush1.bf16.msra.mxu0 0
      %554 = vmatprep.subr.bf16.mxu0 0
      %555 = vmatpush1.bf16.msra.mxu0 0
      %556 = vmatprep.subr.bf16.mxu0 0
      %557 = vmatpush1.bf16.msra.mxu0 0
      %558 = vmatprep.subr.bf16.mxu0 0
      %559 = vmatpush1.bf16.msra.mxu0 0
      %560 = vmatprep.subr.bf16.mxu0 0
      %561 = vmatpush1.bf16.msra.mxu0 0
      %562 = vmatprep.subr.bf16.mxu0 0
      %563 = vmatpush1.bf16.msra.mxu0 0
      %564 = vmatprep.subr.bf16.mxu0 0
      %565 = vmatpush1.bf16.msra.mxu0 0
      %566 = vmatprep.subr.bf16.mxu0 0
      %567 = vmatpush1.bf16.msra.mxu0 0
      %568 = vmatprep.mubr.bf16.mxu0 0
      %569 = vmatmul.mubr.bf16.gmra.mrb[0].mxu0 %v522
      %v570 = vpop.f32.mrb[0].mxu0
      %v571 = vadd.f32 0.0, %v570
      %v572 = vpop.f32.mrb[0].mxu0
      %v573 = vpop.f32.mrb[0].mxu0
      %v574 = vadd.f32 0.0, %v573
      %v575 = vpop.f32.mrb[0].mxu0
      %576 = vmatprep.mubr.bf16.mxu0 0
      %577 = vmatmul.mubr.bf16.gmra.mrb[0].mxu0 %v525
      %v578 = vpop.f32.mrb[0].mxu0
      %v579 = vadd.f32 0.0, %v578
      %v580 = vpop.f32.mrb[0].mxu0
      %v581 = vpop.f32.mrb[0].mxu0
      %v582 = vadd.f32 0.0, %v581
      %v583 = vpop.f32.mrb[0].mxu0
      %584 = vmatprep.mubr.bf16.mxu0 0
      %585 = vmatmul.mubr.bf16.gmra.mrb[0].mxu0 %v528
      %v586 = vpop.f32.mrb[0].mxu0
      %v587 = vadd.f32 0.0, %v586
      %v588 = vpop.f32.mrb[0].mxu0
      %v589 = vpop.f32.mrb[0].mxu0
      %v590 = vadd.f32 0.0, %v589
      %v591 = vpop.f32.mrb[0].mxu0
      %592 = vmatprep.mubr.bf16.mxu0 0
      %593 = vmatmul.mubr.bf16.gmra.mrb[0].mxu0 %v531
      %v594 = vpop.f32.mrb[0].mxu0
      %v595 = vadd.f32 0.0, %v594
      %v596 = vpop.f32.mrb[0].mxu0
      %v597 = vpop.f32.mrb[0].mxu0
      %v598 = vadd.f32 0.0, %v597
      %v599 = vpop.f32.mrb[0].mxu0
      %600 = vmatprep.mubr.bf16.mxu0 0
      %601 = vmatmul.mubr.bf16.gmra.mrb[0].mxu0 %v534
      %v602 = vpop.f32.mrb[0].mxu0
      %v603 = vadd.f32 0.0, %v602
      %v604 = vpop.f32.mrb[0].mxu0
      %v605 = vpop.f32.mrb[0].mxu0
      %v606 = vadd.f32 0.0, %v605
      %v607 = vpop.f32.mrb[0].mxu0
      %608 = vdwg.mxu0
      %v609 = vadd.f32 %v458, %v571
      %v610 = vadd.f32 %v461, %v574
      %v611 = vadd.f32 %v466, %v579
      %v612 = vadd.f32 %v469, %v582
      %v613 = vadd.f32 %v474, %v587
      %v614 = vadd.f32 %v477, %v590
      %v615 = vadd.f32 %v482, %v595
      %v616 = vadd.f32 %v485, %v598
      %v617 = vadd.f32 %v490, %v603
      %v618 = vadd.f32 %v493, %v606
      %v619 = vld [vmem:[%s206 + $0x4] sm:$0xe]
      %v620 = vld [vmem:[%s206 + $0x8] sm:$0xf]
      %v621 = vld [vmem:[%s206 + $0xc] sm:$0xf]
      %v622 = vld [vmem:[%s206 + $0x10] sm:$0xf]
      %v623 = vld [vmem:[%s206 + $0x14] sm:$0xf]
      %v624 = vld [vmem:[%s206 + $0x18] sm:$0xf]
      %v625 = vld [vmem:[%s206 + $0x1c] sm:$0xf]
      %v626 = vld [vmem:[%s206 + $0x20] sm:$0xf]
      %v627 = vld [vmem:[%s206 + $0x24] sm:$0xf]
      %v628 = vld [vmem:[%s206 + $0x28] sm:$0xf]
      %v629 = vld [vmem:[%s206 + $0x2c] sm:$0x1]
      %s630 = scalar_lea.vmem %s210, 24
      %v631 = vld [vmem:[%s630] sm:$0xf]
      %v632 = vld [vmem:[%s630 + $0x4] sm:$0xf]
      %v644 = vunpack.c.l.b16 %v619
      %v645 = vunpack.c.l.b16 %v620
      %v646 = vunpack.c.l.b16 %v621
      %v647 = vunpack.c.l.b16 %v622
      %v648 = vunpack.c.l.b16 %v623
      %v649 = vunpack.c.l.b16 %v624
      %v650 = vunpack.c.l.b16 %v625
      %v651 = vunpack.c.l.b16 %v626
      %v652 = vunpack.c.l.b16 %v627
      %v653 = vunpack.c.l.b16 %v628
      %v654 = vunpack.c.l.b16 %v629
      %v655 = vpack.c.b16 %v645, %v644
      %v656 = vpack.c.b16 %v647, %v646
      %v657 = vpack.c.b16 %v649, %v648
      %v658 = vpack.c.b16 %v651, %v650
      %v659 = vpack.c.b16 %v653, %v652
      %v660 = vpack.c.b16 %v654, %v654
      %v661 = vrot.slane %v655, 1
      %v662 = vrot.slane %v656, 1
      %v663 = vsel %vm503, %v661, %v662
      %v664 = vrot.slane %v657, 1
      %v665 = vsel %vm503, %v662, %v664
      %v666 = vrot.slane %v658, 1
      %v667 = vsel %vm503, %v664, %v666
      %v668 = vrot.slane %v659, 1
      %v669 = vsel %vm503, %v666, %v668
      %v670 = vrot.slane %v660, 1
      %v671 = vsel %vm503, %v668, %v670
      %v674 = vunpack.c.l.b16 %v631
      %v675 = vunpack.c.l.b16 %v632
      %v676 = vpack.c.b16 %v675, %v674
      %v679 = vsel %vm318, %v663, 0
      %v682 = vsel %vm318, %v665, 0
      %v685 = vsel %vm318, %v667, 0
      %v688 = vsel %vm318, %v669, 0
      %v691 = vsel %vm318, %v671, 0
      %693 = vmatprep.subr.bf16.mxu0 0
      %694 = vmatpush1.bf16.msra.mxu0 %v676
      %695 = vmatprep.subr.bf16.mxu0 0
      %696 = vmatpush1.bf16.msra.mxu0 0
      %697 = vmatprep.subr.bf16.mxu0 0
      %698 = vmatpush1.bf16.msra.mxu0 0
      %699 = vmatprep.subr.bf16.mxu0 0
      %700 = vmatpush1.bf16.msra.mxu0 0
      %701 = vmatprep.subr.bf16.mxu0 0
      %702 = vmatpush1.bf16.msra.mxu0 0
      %703 = vmatprep.subr.bf16.mxu0 0
      %704 = vmatpush1.bf16.msra.mxu0 0
      %705 = vmatprep.subr.bf16.mxu0 0
      %706 = vmatpush1.bf16.msra.mxu0 0
      %707 = vmatprep.subr.bf16.mxu0 0
      %708 = vmatpush1.bf16.msra.mxu0 0
      %709 = vmatprep.subr.bf16.mxu0 0
      %710 = vmatpush1.bf16.msra.mxu0 0
      %711 = vmatprep.subr.bf16.mxu0 0
      %712 = vmatpush1.bf16.msra.mxu0 0
      %713 = vmatprep.subr.bf16.mxu0 0
      %714 = vmatpush1.bf16.msra.mxu0 0
      %715 = vmatprep.subr.bf16.mxu0 0
      %716 = vmatpush1.bf16.msra.mxu0 0
      %717 = vmatprep.subr.bf16.mxu0 0
      %718 = vmatpush1.bf16.msra.mxu0 0
      %719 = vmatprep.subr.bf16.mxu0 0
      %720 = vmatpush1.bf16.msra.mxu0 0
      %721 = vmatprep.subr.bf16.mxu0 0
      %722 = vmatpush1.bf16.msra.mxu0 0
      %723 = vmatprep.subr.bf16.mxu0 0
      %724 = vmatpush1.bf16.msra.mxu0 0
      %725 = vmatprep.mubr.bf16.mxu0 0
      %726 = vmatmul.mubr.bf16.gmra.mrb[0].mxu0 %v679
      %v727 = vpop.f32.mrb[0].mxu0
      %v728 = vadd.f32 0.0, %v727
      %v729 = vpop.f32.mrb[0].mxu0
      %v730 = vpop.f32.mrb[0].mxu0
      %v731 = vadd.f32 0.0, %v730
      %v732 = vpop.f32.mrb[0].mxu0
      %733 = vmatprep.mubr.bf16.mxu0 0
      %734 = vmatmul.mubr.bf16.gmra.mrb[0].mxu0 %v682
      %v735 = vpop.f32.mrb[0].mxu0
      %v736 = vadd.f32 0.0, %v735
      %v737 = vpop.f32.mrb[0].mxu0
      %v738 = vpop.f32.mrb[0].mxu0
      %v739 = vadd.f32 0.0, %v738
      %v740 = vpop.f32.mrb[0].mxu0
      %741 = vmatprep.mubr.bf16.mxu0 0
      %742 = vmatmul.mubr.bf16.gmra.mrb[0].mxu0 %v685
      %v743 = vpop.f32.mrb[0].mxu0
      %v744 = vadd.f32 0.0, %v743
      %v745 = vpop.f32.mrb[0].mxu0
      %v746 = vpop.f32.mrb[0].mxu0
      %v747 = vadd.f32 0.0, %v746
      %v748 = vpop.f32.mrb[0].mxu0
      %749 = vmatprep.mubr.bf16.mxu0 0
      %750 = vmatmul.mubr.bf16.gmra.mrb[0].mxu0 %v688
      %v751 = vpop.f32.mrb[0].mxu0
      %v752 = vadd.f32 0.0, %v751
      %v753 = vpop.f32.mrb[0].mxu0
      %v754 = vpop.f32.mrb[0].mxu0
      %v755 = vadd.f32 0.0, %v754
      %v756 = vpop.f32.mrb[0].mxu0
      %757 = vmatprep.mubr.bf16.mxu0 0
      %758 = vmatmul.mubr.bf16.gmra.mrb[0].mxu0 %v691
      %v759 = vpop.f32.mrb[0].mxu0
      %v760 = vadd.f32 0.0, %v759
      %v761 = vpop.f32.mrb[0].mxu0
      %v762 = vpop.f32.mrb[0].mxu0
      %v763 = vadd.f32 0.0, %v762
      %v764 = vpop.f32.mrb[0].mxu0
      %765 = vdwg.mxu0
      %v766 = vadd.f32 %v609, %v728
      %v767 = vadd.f32 %v610, %v731
      %v768 = vadd.f32 %v611, %v736
      %v769 = vadd.f32 %v612, %v739
      %v770 = vadd.f32 %v613, %v744
      %v771 = vadd.f32 %v614, %v747
      %v772 = vadd.f32 %v615, %v752
      %v773 = vadd.f32 %v616, %v755
      %v774 = vadd.f32 %v617, %v760
      %v775 = vadd.f32 %v618, %v763
      %v776 = vld [vmem:[%s206 + $0x2c] sm:$0x3]
      %s777 = scalar_lea.vmem %s210, 32
      %v778 = vld [vmem:[%s777] sm:$0xf]
      %v779 = vld [vmem:[%s777 + $0x4] sm:$0xf]
      %v781 = vunpack.c.l.b16 %v776
      %v782 = vpack.c.b16 %v781, %v781
      %vm783 = vsmask.f32 6400
      %v785 = vshrl.u32 %v655, 16
      %v787 = vrot.slane %v785, 1
      %v788 = vshll.u32 %v655, 16
      %v790 = vrot.slane %v788, 2
      %v791 = vor.u32 %v787, %v790
      %v793 = vshrl.u32 %v656, 16
      %v795 = vrot.slane %v793, 1
      %v796 = vshll.u32 %v656, 16
      %v798 = vrot.slane %v796, 2
      %v799 = vor.u32 %v795, %v798
      %v800 = vsel %vm783, %v791, %v799
      %v802 = vshrl.u32 %v657, 16
      %v804 = vrot.slane %v802, 1
      %v805 = vshll.u32 %v657, 16
      %v807 = vrot.slane %v805, 2
      %v808 = vor.u32 %v804, %v807
      %v809 = vsel %vm783, %v799, %v808
      %v811 = vshrl.u32 %v658, 16
      %v813 = vrot.slane %v811, 1
      %v814 = vshll.u32 %v658, 16
      %v816 = vrot.slane %v814, 2
      %v817 = vor.u32 %v813, %v816
      %v818 = vsel %vm783, %v808, %v817
      %v820 = vshrl.u32 %v659, 16
      %v822 = vrot.slane %v820, 1
      %v823 = vshll.u32 %v659, 16
      %v825 = vrot.slane %v823, 2
      %v826 = vor.u32 %v822, %v825
      %v827 = vsel %vm783, %v817, %v826
      %v829 = vshrl.u32 %v782, 16
      %v831 = vrot.slane %v829, 1
      %v832 = vshll.u32 %v782, 16
      %v834 = vrot.slane %v832, 2
      %v835 = vor.u32 %v831, %v834
      %v836 = vsel %vm783, %v826, %v835
      %v839 = vunpack.c.l.b16 %v778
      %v840 = vunpack.c.l.b16 %v779
      %v841 = vpack.c.b16 %v840, %v839
      %v844 = vsel %vm318, %v800, 0
      %v847 = vsel %vm318, %v809, 0
      %v850 = vsel %vm318, %v818, 0
      %v853 = vsel %vm318, %v827, 0
      %v856 = vsel %vm318, %v836, 0
      %858 = vmatprep.subr.bf16.mxu0 0
      %859 = vmatpush1.bf16.msra.mxu0 %v841
      %860 = vmatprep.subr.bf16.mxu0 0
      %861 = vmatpush1.bf16.msra.mxu0 0
      %862 = vmatprep.subr.bf16.mxu0 0
      %863 = vmatpush1.bf16.msra.mxu0 0
      %864 = vmatprep.subr.bf16.mxu0 0
      %865 = vmatpush1.bf16.msra.mxu0 0
      %866 = vmatprep.subr.bf16.mxu0 0
      %867 = vmatpush1.bf16.msra.mxu0 0
      %868 = vmatprep.subr.bf16.mxu0 0
      %869 = vmatpush1.bf16.msra.mxu0 0
      %870 = vmatprep.subr.bf16.mxu0 0
      %871 = vmatpush1.bf16.msra.mxu0 0
      %872 = vmatprep.subr.bf16.mxu0 0
      %873 = vmatpush1.bf16.msra.mxu0 0
      %874 = vmatprep.subr.bf16.mxu0 0
      %875 = vmatpush1.bf16.msra.mxu0 0
      %876 = vmatprep.subr.bf16.mxu0 0
      %877 = vmatpush1.bf16.msra.mxu0 0
      %878 = vmatprep.subr.bf16.mxu0 0
      %879 = vmatpush1.bf16.msra.mxu0 0
      %880 = vmatprep.subr.bf16.mxu0 0
      %881 = vmatpush1.bf16.msra.mxu0 0
      %882 = vmatprep.subr.bf16.mxu0 0
      %883 = vmatpush1.bf16.msra.mxu0 0
      %884 = vmatprep.subr.bf16.mxu0 0
      %885 = vmatpush1.bf16.msra.mxu0 0
      %886 = vmatprep.subr.bf16.mxu0 0
      %887 = vmatpush1.bf16.msra.mxu0 0
      %888 = vmatprep.subr.bf16.mxu0 0
      %889 = vmatpush1.bf16.msra.mxu0 0
      %890 = vmatprep.mubr.bf16.mxu0 0
      %891 = vmatmul.mubr.bf16.gmra.mrb[0].mxu0 %v844
      %v892 = vpop.f32.mrb[0].mxu0
      %v893 = vadd.f32 0.0, %v892
      %v894 = vpop.f32.mrb[0].mxu0
      %v895 = vpop.f32.mrb[0].mxu0
      %v896 = vadd.f32 0.0, %v895
      %v897 = vpop.f32.mrb[0].mxu0
      %898 = vmatprep.mubr.bf16.mxu0 0
      %899 = vmatmul.mubr.bf16.gmra.mrb[0].mxu0 %v847
      %v900 = vpop.f32.mrb[0].mxu0
      %v901 = vadd.f32 0.0, %v900
      %v902 = vpop.f32.mrb[0].mxu0
      %v903 = vpop.f32.mrb[0].mxu0
      %v904 = vadd.f32 0.0, %v903
      %v905 = vpop.f32.mrb[0].mxu0
      %906 = vmatprep.mubr.bf16.mxu0 0
      %907 = vmatmul.mubr.bf16.gmra.mrb[0].mxu0 %v850
      %v908 = vpop.f32.mrb[0].mxu0
      %v909 = vadd.f32 0.0, %v908
      %v910 = vpop.f32.mrb[0].mxu0
      %v911 = vpop.f32.mrb[0].mxu0
      %v912 = vadd.f32 0.0, %v911
      %v913 = vpop.f32.mrb[0].mxu0
      %914 = vmatprep.mubr.bf16.mxu0 0
      %915 = vmatmul.mubr.bf16.gmra.mrb[0].mxu0 %v853
      %v916 = vpop.f32.mrb[0].mxu0
      %v917 = vadd.f32 0.0, %v916
      %v918 = vpop.f32.mrb[0].mxu0
      %v919 = vpop.f32.mrb[0].mxu0
      %v920 = vadd.f32 0.0, %v919
      %v921 = vpop.f32.mrb[0].mxu0
      %922 = vmatprep.mubr.bf16.mxu0 0
      %923 = vmatmul.mubr.bf16.gmra.mrb[0].mxu0 %v856
      %v924 = vpop.f32.mrb[0].mxu0
      %v925 = vadd.f32 0.0, %v924
      %v926 = vpop.f32.mrb[0].mxu0
      %v927 = vpop.f32.mrb[0].mxu0
      %v928 = vadd.f32 0.0, %v927
      %v929 = vpop.f32.mrb[0].mxu0
      %930 = vdwg.mxu0
      %v931 = vadd.f32 %v766, %v893
      %v932 = vadd.f32 %v767, %v896
      %v933 = vadd.f32 %v768, %v901
      %v934 = vadd.f32 %v769, %v904
      %v935 = vadd.f32 %v770, %v909
      %v936 = vadd.f32 %v771, %v912
      %v937 = vadd.f32 %v772, %v917
      %v938 = vadd.f32 %v773, %v920
      %v939 = vadd.f32 %v774, %v925
      %v940 = vadd.f32 %v775, %v928
      %v941 = vld [vmem:[%s206 + $0x4] sm:$0xc]
      %s942 = scalar_lea.vmem %s210, 40
      %v943 = vld [vmem:[%s942] sm:$0xf]
      %v944 = vld [vmem:[%s942 + $0x4] sm:$0xf]
      %v946 = vunpack.c.l.b16 %v941
      %v947 = vpack.c.b16 %v645, %v946
      %vm948 = vcmask 1045504
      %v949 = vrot.slane %v947, 2
      %v950 = vrot.slane %v656, 2
      %v951 = vsel %vm948, %v949, %v950
      %v952 = vrot.slane %v657, 2
      %v953 = vsel %vm948, %v950, %v952
      %v954 = vrot.slane %v658, 2
      %v955 = vsel %vm948, %v952, %v954
      %v956 = vrot.slane %v659, 2
      %v957 = vsel %vm948, %v954, %v956
      %v958 = vrot.slane %v782, 2
      %v959 = vsel %vm948, %v956, %v958
      %v962 = vunpack.c.l.b16 %v943
      %v963 = vunpack.c.l.b16 %v944
      %v964 = vpack.c.b16 %v963, %v962
      %v967 = vsel %vm318, %v951, 0
      %v970 = vsel %vm318, %v953, 0
      %v973 = vsel %vm318, %v955, 0
      %v976 = vsel %vm318, %v957, 0
      %v979 = vsel %vm318, %v959, 0
      %981 = vmatprep.subr.bf16.mxu0 0
      %982 = vmatpush1.bf16.msra.mxu0 %v964
      %983 = vmatprep.subr.bf16.mxu0 0
      %984 = vmatpush1.bf16.msra.mxu0 0
      %985 = vmatprep.subr.bf16.mxu0 0
      %986 = vmatpush1.bf16.msra.mxu0 0
      %987 = vmatprep.subr.bf16.mxu0 0
      %988 = vmatpush1.bf16.msra.mxu0 0
      %989 = vmatprep.subr.bf16.mxu0 0
      %990 = vmatpush1.bf16.msra.mxu0 0
      %991 = vmatprep.subr.bf16.mxu0 0
      %992 = vmatpush1.bf16.msra.mxu0 0
      %993 = vmatprep.subr.bf16.mxu0 0
      %994 = vmatpush1.bf16.msra.mxu0 0
      %995 = vmatprep.subr.bf16.mxu0 0
      %996 = vmatpush1.bf16.msra.mxu0 0
      %997 = vmatprep.subr.bf16.mxu0 0
      %998 = vmatpush1.bf16.msra.mxu0 0
      %999 = vmatprep.subr.bf16.mxu0 0
      %1000 = vmatpush1.bf16.msra.mxu0 0
      %1001 = vmatprep.subr.bf16.mxu0 0
      %1002 = vmatpush1.bf16.msra.mxu0 0
      %1003 = vmatprep.subr.bf16.mxu0 0
      %1004 = vmatpush1.bf16.msra.mxu0 0
      %1005 = vmatprep.subr.bf16.mxu0 0
      %1006 = vmatpush1.bf16.msra.mxu0 0
      %1007 = vmatprep.subr.bf16.mxu0 0
      %1008 = vmatpush1.bf16.msra.mxu0 0
      %1009 = vmatprep.subr.bf16.mxu0 0
      %1010 = vmatpush1.bf16.msra.mxu0 0
      %1011 = vmatprep.subr.bf16.mxu0 0
      %1012 = vmatpush1.bf16.msra.mxu0 0
      %1013 = vmatprep.mubr.bf16.mxu0 0
      %1014 = vmatmul.mubr.bf16.gmra.mrb[0].mxu0 %v967
      %v1015 = vpop.f32.mrb[0].mxu0
      %v1016 = vadd.f32 0.0, %v1015
      %v1017 = vpop.f32.mrb[0].mxu0
      %v1018 = vpop.f32.mrb[0].mxu0
      %v1019 = vadd.f32 0.0, %v1018
      %v1020 = vpop.f32.mrb[0].mxu0
      %1021 = vmatprep.mubr.bf16.mxu0 0
      %1022 = vmatmul.mubr.bf16.gmra.mrb[0].mxu0 %v970
      %v1023 = vpop.f32.mrb[0].mxu0
      %v1024 = vadd.f32 0.0, %v1023
      %v1025 = vpop.f32.mrb[0].mxu0
      %v1026 = vpop.f32.mrb[0].mxu0
      %v1027 = vadd.f32 0.0, %v1026
      %v1028 = vpop.f32.mrb[0].mxu0
      %1029 = vmatprep.mubr.bf16.mxu0 0
      %1030 = vmatmul.mubr.bf16.gmra.mrb[0].mxu0 %v973
      %v1031 = vpop.f32.mrb[0].mxu0
      %v1032 = vadd.f32 0.0, %v1031
      %v1033 = vpop.f32.mrb[0].mxu0
      %v1034 = vpop.f32.mrb[0].mxu0
      %v1035 = vadd.f32 0.0, %v1034
      %v1036 = vpop.f32.mrb[0].mxu0
      %1037 = vmatprep.mubr.bf16.mxu0 0
      %1038 = vmatmul.mubr.bf16.gmra.mrb[0].mxu0 %v976
      %v1039 = vpop.f32.mrb[0].mxu0
      %v1040 = vadd.f32 0.0, %v1039
      %v1041 = vpop.f32.mrb[0].mxu0
      %v1042 = vpop.f32.mrb[0].mxu0
      %v1043 = vadd.f32 0.0, %v1042
      %v1044 = vpop.f32.mrb[0].mxu0
      %1045 = vmatprep.mubr.bf16.mxu0 0
      %1046 = vmatmul.mubr.bf16.gmra.mrb[0].mxu0 %v979
      %v1047 = vpop.f32.mrb[0].mxu0
      %v1048 = vadd.f32 0.0, %v1047
      %v1049 = vpop.f32.mrb[0].mxu0
      %v1050 = vpop.f32.mrb[0].mxu0
      %v1051 = vadd.f32 0.0, %v1050
      %v1052 = vpop.f32.mrb[0].mxu0
      %1053 = vdwg.mxu0
      %v1054 = vadd.f32 %v931, %v1016
      %v1055 = vadd.f32 %v932, %v1019
      %v1056 = vadd.f32 %v933, %v1024
      %v1057 = vadd.f32 %v934, %v1027
      %v1058 = vadd.f32 %v935, %v1032
      %v1059 = vadd.f32 %v936, %v1035
      %v1060 = vadd.f32 %v937, %v1040
      %v1061 = vadd.f32 %v938, %v1043
      %v1062 = vadd.f32 %v939, %v1048
      %v1063 = vadd.f32 %v940, %v1051
      %v1064 = vld [vmem:[%s206 + $0x8] sm:$0xc]
      %v1065 = vld [vmem:[%s206 + $0xc] sm:$0xf]
      %v1066 = vld [vmem:[%s206 + $0x10] sm:$0xf]
      %v1067 = vld [vmem:[%s206 + $0x14] sm:$0xf]
      %v1068 = vld [vmem:[%s206 + $0x18] sm:$0xf]
      %v1069 = vld [vmem:[%s206 + $0x1c] sm:$0xf]
      %v1070 = vld [vmem:[%s206 + $0x20] sm:$0xf]
      %v1071 = vld [vmem:[%s206 + $0x24] sm:$0xf]
      %v1072 = vld [vmem:[%s206 + $0x28] sm:$0xf]
      %v1073 = vld [vmem:[%s206 + $0x2c] sm:$0xf]
      %v1074 = vld [vmem:[%s206 + $0x30] sm:$0x3]
      %s1075 = scalar_lea.vmem %s210, 48
      %v1076 = vld [vmem:[%s1075] sm:$0xf]
      %v1077 = vld [vmem:[%s1075 + $0x4] sm:$0xf]
      %v1089 = vunpack.c.l.b16 %v1064
      %v1090 = vunpack.c.l.b16 %v1065
      %v1091 = vunpack.c.l.b16 %v1066
      %v1092 = vunpack.c.l.b16 %v1067
      %v1093 = vunpack.c.l.b16 %v1068
      %v1094 = vunpack.c.l.b16 %v1069
      %v1095 = vunpack.c.l.b16 %v1070
      %v1096 = vunpack.c.l.b16 %v1071
      %v1097 = vunpack.c.l.b16 %v1072
      %v1098 = vunpack.c.l.b16 %v1073
      %v1099 = vunpack.c.l.b16 %v1074
      %v1100 = vpack.c.b16 %v1090, %v1089
      %v1101 = vpack.c.b16 %v1092, %v1091
      %v1102 = vpack.c.b16 %v1094, %v1093
      %v1103 = vpack.c.b16 %v1096, %v1095
      %v1104 = vpack.c.b16 %v1098, %v1097
      %v1105 = vpack.c.b16 %v1099, %v1099
      %v1106 = vrot.slane %v1100, 2
      %v1107 = vrot.slane %v1101, 2
      %v1108 = vsel %vm948, %v1106, %v1107
      %v1109 = vrot.slane %v1102, 2
      %v1110 = vsel %vm948, %v1107, %v1109
      %v1111 = vrot.slane %v1103, 2
      %v1112 = vsel %vm948, %v1109, %v1111
      %v1113 = vrot.slane %v1104, 2
      %v1114 = vsel %vm948, %v1111, %v1113
      %v1115 = vrot.slane %v1105, 2
      %v1116 = vsel %vm948, %v1113, %v1115
      %v1119 = vunpack.c.l.b16 %v1076
      %v1120 = vunpack.c.l.b16 %v1077
      %v1121 = vpack.c.b16 %v1120, %v1119
      %v1124 = vsel %vm318, %v1108, 0
      %v1127 = vsel %vm318, %v1110, 0
      %v1130 = vsel %vm318, %v1112, 0
      %v1133 = vsel %vm318, %v1114, 0
      %v1136 = vsel %vm318, %v1116, 0
      %1138 = vmatprep.subr.bf16.mxu0 0
      %1139 = vmatpush1.bf16.msra.mxu0 %v1121
      %1140 = vmatprep.subr.bf16.mxu0 0
      %1141 = vmatpush1.bf16.msra.mxu0 0
      %1142 = vmatprep.subr.bf16.mxu0 0
      %1143 = vmatpush1.bf16.msra.mxu0 0
      %1144 = vmatprep.subr.bf16.mxu0 0
      %1145 = vmatpush1.bf16.msra.mxu0 0
      %1146 = vmatprep.subr.bf16.mxu0 0
      %1147 = vmatpush1.bf16.msra.mxu0 0
      %1148 = vmatprep.subr.bf16.mxu0 0
      %1149 = vmatpush1.bf16.msra.mxu0 0
      %1150 = vmatprep.subr.bf16.mxu0 0
      %1151 = vmatpush1.bf16.msra.mxu0 0
      %1152 = vmatprep.subr.bf16.mxu0 0
      %1153 = vmatpush1.bf16.msra.mxu0 0
      %1154 = vmatprep.subr.bf16.mxu0 0
      %1155 = vmatpush1.bf16.msra.mxu0 0
      %1156 = vmatprep.subr.bf16.mxu0 0
      %1157 = vmatpush1.bf16.msra.mxu0 0
      %1158 = vmatprep.subr.bf16.mxu0 0
      %1159 = vmatpush1.bf16.msra.mxu0 0
      %1160 = vmatprep.subr.bf16.mxu0 0
      %1161 = vmatpush1.bf16.msra.mxu0 0
      %1162 = vmatprep.subr.bf16.mxu0 0
      %1163 = vmatpush1.bf16.msra.mxu0 0
      %1164 = vmatprep.subr.bf16.mxu0 0
      %1165 = vmatpush1.bf16.msra.mxu0 0
      %1166 = vmatprep.subr.bf16.mxu0 0
      %1167 = vmatpush1.bf16.msra.mxu0 0
      %1168 = vmatprep.subr.bf16.mxu0 0
      %1169 = vmatpush1.bf16.msra.mxu0 0
      %1170 = vmatprep.mubr.bf16.mxu0 0
      %1171 = vmatmul.mubr.bf16.gmra.mrb[0].mxu0 %v1124
      %v1172 = vpop.f32.mrb[0].mxu0
      %v1173 = vadd.f32 0.0, %v1172
      %v1174 = vpop.f32.mrb[0].mxu0
      %v1175 = vpop.f32.mrb[0].mxu0
      %v1176 = vadd.f32 0.0, %v1175
      %v1177 = vpop.f32.mrb[0].mxu0
      %1178 = vmatprep.mubr.bf16.mxu0 0
      %1179 = vmatmul.mubr.bf16.gmra.mrb[0].mxu0 %v1127
      %v1180 = vpop.f32.mrb[0].mxu0
      %v1181 = vadd.f32 0.0, %v1180
      %v1182 = vpop.f32.mrb[0].mxu0
      %v1183 = vpop.f32.mrb[0].mxu0
      %v1184 = vadd.f32 0.0, %v1183
      %v1185 = vpop.f32.mrb[0].mxu0
      %1186 = vmatprep.mubr.bf16.mxu0 0
      %1187 = vmatmul.mubr.bf16.gmra.mrb[0].mxu0 %v1130
      %v1188 = vpop.f32.mrb[0].mxu0
      %v1189 = vadd.f32 0.0, %v1188
      %v1190 = vpop.f32.mrb[0].mxu0
      %v1191 = vpop.f32.mrb[0].mxu0
      %v1192 = vadd.f32 0.0, %v1191
      %v1193 = vpop.f32.mrb[0].mxu0
      %1194 = vmatprep.mubr.bf16.mxu0 0
      %1195 = vmatmul.mubr.bf16.gmra.mrb[0].mxu0 %v1133
      %v1196 = vpop.f32.mrb[0].mxu0
      %v1197 = vadd.f32 0.0, %v1196
      %v1198 = vpop.f32.mrb[0].mxu0
      %v1199 = vpop.f32.mrb[0].mxu0
      %v1200 = vadd.f32 0.0, %v1199
      %v1201 = vpop.f32.mrb[0].mxu0
      %1202 = vmatprep.mubr.bf16.mxu0 0
      %1203 = vmatmul.mubr.bf16.gmra.mrb[0].mxu0 %v1136
      %v1204 = vpop.f32.mrb[0].mxu0
      %v1205 = vadd.f32 0.0, %v1204
      %v1206 = vpop.f32.mrb[0].mxu0
      %v1207 = vpop.f32.mrb[0].mxu0
      %v1208 = vadd.f32 0.0, %v1207
      %v1209 = vpop.f32.mrb[0].mxu0
      %1210 = vdwg.mxu0
      %v1211 = vadd.f32 %v1054, %v1173
      %v1212 = vadd.f32 %v1055, %v1176
      %v1213 = vadd.f32 %v1056, %v1181
      %v1214 = vadd.f32 %v1057, %v1184
      %v1215 = vadd.f32 %v1058, %v1189
      %v1216 = vadd.f32 %v1059, %v1192
      %v1217 = vadd.f32 %v1060, %v1197
      %v1218 = vadd.f32 %v1061, %v1200
      %v1219 = vadd.f32 %v1062, %v1205
      %v1220 = vadd.f32 %v1063, %v1208
      %v1221 = vld [vmem:[%s206 + $0x30] sm:$0x7]
      %s1222 = scalar_lea.vmem %s210, 56
      %v1223 = vld [vmem:[%s1222] sm:$0xf]
      %v1224 = vld [vmem:[%s1222 + $0x4] sm:$0xf]
      %v1226 = vunpack.c.l.b16 %v1221
      %v1227 = vpack.c.b16 %v1226, %v1226
      %vm1228 = vsmask.f32 5376
      %v1230 = vshrl.u32 %v1100, 16
      %v1232 = vrot.slane %v1230, 2
      %v1233 = vshll.u32 %v1100, 16
      %v1235 = vrot.slane %v1233, 3
      %v1236 = vor.u32 %v1232, %v1235
      %v1238 = vshrl.u32 %v1101, 16
      %v1240 = vrot.slane %v1238, 2
      %v1241 = vshll.u32 %v1101, 16
      %v1243 = vrot.slane %v1241, 3
      %v1244 = vor.u32 %v1240, %v1243
      %v1245 = vsel %vm1228, %v1236, %v1244
      %v1247 = vshrl.u32 %v1102, 16
      %v1249 = vrot.slane %v1247, 2
      %v1250 = vshll.u32 %v1102, 16
      %v1252 = vrot.slane %v1250, 3
      %v1253 = vor.u32 %v1249, %v1252
      %v1254 = vsel %vm1228, %v1244, %v1253
      %v1256 = vshrl.u32 %v1103, 16
      %v1258 = vrot.slane %v1256, 2
      %v1259 = vshll.u32 %v1103, 16
      %v1261 = vrot.slane %v1259, 3
      %v1262 = vor.u32 %v1258, %v1261
      %v1263 = vsel %vm1228, %v1253, %v1262
      %v1265 = vshrl.u32 %v1104, 16
      %v1267 = vrot.slane %v1265, 2
      %v1268 = vshll.u32 %v1104, 16
      %v1270 = vrot.slane %v1268, 3
      %v1271 = vor.u32 %v1267, %v1270
      %v1272 = vsel %vm1228, %v1262, %v1271
      %v1274 = vshrl.u32 %v1227, 16
      %v1276 = vrot.slane %v1274, 2
      %v1277 = vshll.u32 %v1227, 16
      %v1279 = vrot.slane %v1277, 3
      %v1280 = vor.u32 %v1276, %v1279
      %v1281 = vsel %vm1228, %v1271, %v1280
      %v1284 = vunpack.c.l.b16 %v1223
      %v1285 = vunpack.c.l.b16 %v1224
      %v1286 = vpack.c.b16 %v1285, %v1284
      %v1289 = vsel %vm318, %v1245, 0
      %v1292 = vsel %vm318, %v1254, 0
      %v1295 = vsel %vm318, %v1263, 0
      %v1298 = vsel %vm318, %v1272, 0
      %v1301 = vsel %vm318, %v1281, 0
      %1303 = vmatprep.subr.bf16.mxu0 0
      %1304 = vmatpush1.bf16.msra.mxu0 %v1286
      %1305 = vmatprep.subr.bf16.mxu0 0
      %1306 = vmatpush1.bf16.msra.mxu0 0
      %1307 = vmatprep.subr.bf16.mxu0 0
      %1308 = vmatpush1.bf16.msra.mxu0 0
      %1309 = vmatprep.subr.bf16.mxu0 0
      %1310 = vmatpush1.bf16.msra.mxu0 0
      %1311 = vmatprep.subr.bf16.mxu0 0
      %1312 = vmatpush1.bf16.msra.mxu0 0
      %1313 = vmatprep.subr.bf16.mxu0 0
      %1314 = vmatpush1.bf16.msra.mxu0 0
      %1315 = vmatprep.subr.bf16.mxu0 0
      %1316 = vmatpush1.bf16.msra.mxu0 0
      %1317 = vmatprep.subr.bf16.mxu0 0
      %1318 = vmatpush1.bf16.msra.mxu0 0
      %1319 = vmatprep.subr.bf16.mxu0 0
      %1320 = vmatpush1.bf16.msra.mxu0 0
      %1321 = vmatprep.subr.bf16.mxu0 0
      %1322 = vmatpush1.bf16.msra.mxu0 0
      %1323 = vmatprep.subr.bf16.mxu0 0
      %1324 = vmatpush1.bf16.msra.mxu0 0
      %1325 = vmatprep.subr.bf16.mxu0 0
      %1326 = vmatpush1.bf16.msra.mxu0 0
      %1327 = vmatprep.subr.bf16.mxu0 0
      %1328 = vmatpush1.bf16.msra.mxu0 0
      %1329 = vmatprep.subr.bf16.mxu0 0
      %1330 = vmatpush1.bf16.msra.mxu0 0
      %1331 = vmatprep.subr.bf16.mxu0 0
      %1332 = vmatpush1.bf16.msra.mxu0 0
      %1333 = vmatprep.subr.bf16.mxu0 0
      %1334 = vmatpush1.bf16.msra.mxu0 0
      %1335 = vmatprep.mubr.bf16.mxu0 0
      %1336 = vmatmul.mubr.bf16.gmra.mrb[0].mxu0 %v1289
      %v1337 = vpop.f32.mrb[0].mxu0
      %v1338 = vadd.f32 0.0, %v1337
      %v1339 = vpop.f32.mrb[0].mxu0
      %v1340 = vpop.f32.mrb[0].mxu0
      %v1341 = vadd.f32 0.0, %v1340
      %v1342 = vpop.f32.mrb[0].mxu0
      %1343 = vmatprep.mubr.bf16.mxu0 0
      %1344 = vmatmul.mubr.bf16.gmra.mrb[0].mxu0 %v1292
      %v1345 = vpop.f32.mrb[0].mxu0
      %v1346 = vadd.f32 0.0, %v1345
      %v1347 = vpop.f32.mrb[0].mxu0
      %v1348 = vpop.f32.mrb[0].mxu0
      %v1349 = vadd.f32 0.0, %v1348
      %v1350 = vpop.f32.mrb[0].mxu0
      %1351 = vmatprep.mubr.bf16.mxu0 0
      %1352 = vmatmul.mubr.bf16.gmra.mrb[0].mxu0 %v1295
      %v1353 = vpop.f32.mrb[0].mxu0
      %v1354 = vadd.f32 0.0, %v1353
      %v1355 = vpop.f32.mrb[0].mxu0
      %v1356 = vpop.f32.mrb[0].mxu0
      %v1357 = vadd.f32 0.0, %v1356
      %v1358 = vpop.f32.mrb[0].mxu0
      %1359 = vmatprep.mubr.bf16.mxu0 0
      %1360 = vmatmul.mubr.bf16.gmra.mrb[0].mxu0 %v1298
      %v1361 = vpop.f32.mrb[0].mxu0
      %v1362 = vadd.f32 0.0, %v1361
      %v1363 = vpop.f32.mrb[0].mxu0
      %v1364 = vpop.f32.mrb[0].mxu0
      %v1365 = vadd.f32 0.0, %v1364
      %v1366 = vpop.f32.mrb[0].mxu0
      %1367 = vmatprep.mubr.bf16.mxu0 0
      %1368 = vmatmul.mubr.bf16.gmra.mrb[0].mxu0 %v1301
      %v1369 = vpop.f32.mrb[0].mxu0
      %v1370 = vadd.f32 0.0, %v1369
      %v1371 = vpop.f32.mrb[0].mxu0
      %v1372 = vpop.f32.mrb[0].mxu0
      %v1373 = vadd.f32 0.0, %v1372
      %v1374 = vpop.f32.mrb[0].mxu0
      %1375 = vdwg.mxu0
      %v1376 = vadd.f32 %v1211, %v1338
      %v1377 = vadd.f32 %v1212, %v1341
      %v1378 = vadd.f32 %v1213, %v1346
      %v1379 = vadd.f32 %v1214, %v1349
      %v1380 = vadd.f32 %v1215, %v1354
      %v1381 = vadd.f32 %v1216, %v1357
      %v1382 = vadd.f32 %v1217, %v1362
      %v1383 = vadd.f32 %v1218, %v1365
      %v1384 = vadd.f32 %v1219, %v1370
      %v1385 = vadd.f32 %v1220, %v1373
      %v1386 = vld [vmem:[%s206 + $0x8] sm:$0x8]
      %s1387 = scalar_lea.vmem %s210, 64
      %v1388 = vld [vmem:[%s1387] sm:$0xf]
      %v1389 = vld [vmem:[%s1387 + $0x4] sm:$0xf]
      %v1391 = vunpack.c.l.b16 %v1386
      %v1392 = vpack.c.b16 %v1090, %v1391
      %vm1393 = vcmask 1044480
      %v1394 = vrot.slane %v1392, 3
      %v1395 = vrot.slane %v1101, 3
      %v1396 = vsel %vm1393, %v1394, %v1395
      %v1397 = vrot.slane %v1102, 3
      %v1398 = vsel %vm1393, %v1395, %v1397
      %v1399 = vrot.slane %v1103, 3
      %v1400 = vsel %vm1393, %v1397, %v1399
      %v1401 = vrot.slane %v1104, 3
      %v1402 = vsel %vm1393, %v1399, %v1401
      %v1403 = vrot.slane %v1227, 3
      %v1404 = vsel %vm1393, %v1401, %v1403
      %v1407 = vunpack.c.l.b16 %v1388
      %v1408 = vunpack.c.l.b16 %v1389
      %v1409 = vpack.c.b16 %v1408, %v1407
      %v1412 = vsel %vm318, %v1396, 0
      %v1415 = vsel %vm318, %v1398, 0
      %v1418 = vsel %vm318, %v1400, 0
      %v1421 = vsel %vm318, %v1402, 0
      %v1424 = vsel %vm318, %v1404, 0
      %1426 = vmatprep.subr.bf16.mxu0 0
      %1427 = vmatpush1.bf16.msra.mxu0 %v1409
      %1428 = vmatprep.subr.bf16.mxu0 0
      %1429 = vmatpush1.bf16.msra.mxu0 0
      %1430 = vmatprep.subr.bf16.mxu0 0
      %1431 = vmatpush1.bf16.msra.mxu0 0
      %1432 = vmatprep.subr.bf16.mxu0 0
      %1433 = vmatpush1.bf16.msra.mxu0 0
      %1434 = vmatprep.subr.bf16.mxu0 0
      %1435 = vmatpush1.bf16.msra.mxu0 0
      %1436 = vmatprep.subr.bf16.mxu0 0
      %1437 = vmatpush1.bf16.msra.mxu0 0
      %1438 = vmatprep.subr.bf16.mxu0 0
      %1439 = vmatpush1.bf16.msra.mxu0 0
      %1440 = vmatprep.subr.bf16.mxu0 0
      %1441 = vmatpush1.bf16.msra.mxu0 0
      %1442 = vmatprep.subr.bf16.mxu0 0
      %1443 = vmatpush1.bf16.msra.mxu0 0
      %1444 = vmatprep.subr.bf16.mxu0 0
      %1445 = vmatpush1.bf16.msra.mxu0 0
      %1446 = vmatprep.subr.bf16.mxu0 0
      %1447 = vmatpush1.bf16.msra.mxu0 0
      %1448 = vmatprep.subr.bf16.mxu0 0
      %1449 = vmatpush1.bf16.msra.mxu0 0
      %1450 = vmatprep.subr.bf16.mxu0 0
      %1451 = vmatpush1.bf16.msra.mxu0 0
      %1452 = vmatprep.subr.bf16.mxu0 0
      %1453 = vmatpush1.bf16.msra.mxu0 0
      %1454 = vmatprep.subr.bf16.mxu0 0
      %1455 = vmatpush1.bf16.msra.mxu0 0
      %1456 = vmatprep.subr.bf16.mxu0 0
      %1457 = vmatpush1.bf16.msra.mxu0 0
      %1458 = vmatprep.mubr.bf16.mxu0 0
      %1459 = vmatmul.mubr.bf16.gmra.mrb[0].mxu0 %v1412
      %v1460 = vpop.f32.mrb[0].mxu0
      %v1461 = vadd.f32 0.0, %v1460
      %v1462 = vpop.f32.mrb[0].mxu0
      %v1463 = vpop.f32.mrb[0].mxu0
      %v1464 = vadd.f32 0.0, %v1463
      %v1465 = vpop.f32.mrb[0].mxu0
      %1466 = vmatprep.mubr.bf16.mxu0 0
      %1467 = vmatmul.mubr.bf16.gmra.mrb[0].mxu0 %v1415
      %v1468 = vpop.f32.mrb[0].mxu0
      %v1469 = vadd.f32 0.0, %v1468
      %v1470 = vpop.f32.mrb[0].mxu0
      %v1471 = vpop.f32.mrb[0].mxu0
      %v1472 = vadd.f32 0.0, %v1471
      %v1473 = vpop.f32.mrb[0].mxu0
      %1474 = vmatprep.mubr.bf16.mxu0 0
      %1475 = vmatmul.mubr.bf16.gmra.mrb[0].mxu0 %v1418
      %v1476 = vpop.f32.mrb[0].mxu0
      %v1477 = vadd.f32 0.0, %v1476
      %v1478 = vpop.f32.mrb[0].mxu0
      %v1479 = vpop.f32.mrb[0].mxu0
      %v1480 = vadd.f32 0.0, %v1479
      %v1481 = vpop.f32.mrb[0].mxu0
      %1482 = vmatprep.mubr.bf16.mxu0 0
      %1483 = vmatmul.mubr.bf16.gmra.mrb[0].mxu0 %v1421
      %v1484 = vpop.f32.mrb[0].mxu0
      %v1485 = vadd.f32 0.0, %v1484
      %v1486 = vpop.f32.mrb[0].mxu0
      %v1487 = vpop.f32.mrb[0].mxu0
      %v1488 = vadd.f32 0.0, %v1487
      %v1489 = vpop.f32.mrb[0].mxu0
      %1490 = vmatprep.mubr.bf16.mxu0 0
      %1491 = vmatmul.mubr.bf16.gmra.mrb[0].mxu0 %v1424
      %v1492 = vpop.f32.mrb[0].mxu0
      %v1493 = vadd.f32 0.0, %v1492
      %v1494 = vpop.f32.mrb[0].mxu0
      %v1495 = vpop.f32.mrb[0].mxu0
      %v1496 = vadd.f32 0.0, %v1495
      %v1497 = vpop.f32.mrb[0].mxu0
      %1498 = vdwg.mxu0
      %v1499 = vadd.f32 %v1376, %v1461
      %v1500 = vadd.f32 %v1377, %v1464
      %v1501 = vadd.f32 %v1378, %v1469
      %v1502 = vadd.f32 %v1379, %v1472
      %v1503 = vadd.f32 %v1380, %v1477
      %v1504 = vadd.f32 %v1381, %v1480
      %v1505 = vadd.f32 %v1382, %v1485
      %v1506 = vadd.f32 %v1383, %v1488
      %v1507 = vadd.f32 %v1384, %v1493
      %v1508 = vadd.f32 %v1385, %v1496
      %v1509 = vld [vmem:[%s213] sm:$0x1]
      %v1511 = vlaneseq
      %v1512 = vshrl.u32 %v1511, 7
      %v1513 = vsub.s32 0, %v1512
      %v1514 = vrot.slane %v1509, %v1513
      %v1516 = vadd.f32 %v1499, %v1514
      %v1517 = vadd.f32 %v1500, %v1514
      %v1518 = vadd.f32 %v1501, %v1514
      %v1519 = vadd.f32 %v1502, %v1514
      %v1520 = vadd.f32 %v1503, %v1514
      %v1521 = vadd.f32 %v1504, %v1514
      %v1522 = vadd.f32 %v1505, %v1514
      %v1523 = vadd.f32 %v1506, %v1514
      %v1524 = vadd.f32 %v1507, %v1514
      %v1525 = vadd.f32 %v1508, %v1514
      %vm1526 = vcmask 261120
      %1527 = vst.msk [vmem:[%s221] sm:$0xff] %vm1526, %v1516
      %1528 = vst.msk [vmem:[%s221 + $0x8] sm:$0xff] %vm1526, %v1517
      %1529 = vst.msk [vmem:[%s221 + $0x10] sm:$0xff] %vm1526, %v1518
      %1530 = vst.msk [vmem:[%s221 + $0x18] sm:$0xff] %vm1526, %v1519
      %1531 = vst.msk [vmem:[%s221 + $0x20] sm:$0xff] %vm1526, %v1520
      %1532 = vst.msk [vmem:[%s221 + $0x28] sm:$0xff] %vm1526, %v1521
      %1533 = vst.msk [vmem:[%s221 + $0x30] sm:$0xff] %vm1526, %v1522
      %1534 = vst.msk [vmem:[%s221 + $0x38] sm:$0xff] %vm1526, %v1523
      %1535 = vst.msk [vmem:[%s221 + $0x40] sm:$0xff] %vm1526, %v1524
      %1536 = vst.msk [vmem:[%s221 + $0x48] sm:$0xff] %vm1526, %v1525
      %p1537 = scmp.lt.s32.totalorder %s19, 1
      %s1538 = scalar_select %p1537, %s19, 1
      %p1539 = scmp.lt.s32.totalorder %s18, 0
      %s1540 = scalar_select %p1539, %s18, 0
      %s1541 = smul.addr %s1538, 10
      %s1542 = sadd.s32 %s1540, %s1541
      %s1543 = smul.addr %s1542, 8
      %s1544 = scalar_lea.vmem %s3, %s1543
      // Predicated region
      $region33: #{tpu_custom_call.1} parent=31 // pred_check
        %p1545 = pneg %p124
      $region34: #{tpu_custom_call.1} parent=31 // pred_check_branch
        %1547 = sbr.rel (%p1545) target = $region36
      $region35: #{tpu_custom_call.1} parent=31 // pred_region
        _
      $region36: #{tpu_custom_call.1} parent=31 // pred_fallthru
        _
    $region32: #{tpu_custom_call.1} parent=5 // pred_fallthru
      _
    %p1548 = scmp.le.s32.totalorder 2, %s9
    // Predicated region
    $region37: #{tpu_custom_call.1} parent=5 // pred_check
      %p1549 = pneg %p1548
    $region38: #{tpu_custom_call.1} parent=5 // pred_check_branch
      %1551 = sbr.rel (%p1549) target = $region40
    $region39: #{tpu_custom_call.1} parent=5 // pred_region
      %s1552 = ssub.s32 %s9, 2
      // Predicated region
      $region41: #{tpu_custom_call.1} parent=39 // pred_check
        %p1553 = pneg %p130
      $region42: #{tpu_custom_call.1} parent=39 // pred_check_branch
        %1555 = sbr.rel (%p1553) target = $region44
      $region43: #{tpu_custom_call.1} parent=39 // pred_region
        %p1556 = scmp.lt.s32.totalorder %s21, 1
        %s1557 = scalar_select %p1556, %s21, 1
        %p1558 = scmp.lt.s32.totalorder %s20, 0
        %s1559 = scalar_select %p1558, %s20, 0
        %s1560 = smul.addr %s1557, 10
        %s1561 = sadd.s32 %s1559, %s1560
        %s1562 = smul.addr %s1561, 8
        %s1563 = scalar_lea.vmem %s3, %s1562
      $region44: #{tpu_custom_call.1} parent=39 // pred_fallthru
        _
    $region40: #{tpu_custom_call.1} parent=5 // pred_fallthru
      _
  $region6: #{tpu_custom_call.1} parent=0 // loop_footer
    %s13 = sadd.s32 1, %s9
  $region7: #{tpu_custom_call.1} parent=0 // loop_footer_branch
    %8 = sbr.rel target = $region3
  $region8: #{tpu_custom_call.1} parent=0 // loop_exit
    _

</llo_original>
